<compile_context>
chip_gen: v5e
topology: v5e:2x2
jax: 0.10.0
libtpu: 0.0.40
codegen_flags: <defaults>
</compile_context>

<pallas_src>
import jax
import jax.numpy as jnp
from jax.experimental import pallas as pl
from jax.experimental.pallas import tpu as pltpu

CIN, C1, C2 = 16, 32, 64          # conv channels
K = 3                             # conv kernel width (kernel height is 1)
F1, F2, F3, F4, NCLS = 256, 128, 64, 32, 3
NPAD = 128                        # lane-dense padded width for fc3/fc4/fc5
BN_EPS = 1e-5


def eeg_encoder_kernel(x_ref, w1_ref, w2_ref, fw1_ref, fw2_ref, fw3_ref,
                       fw4_ref, fw5_ref, bias_ref, o_ref):
    # Static per-layer widths from the weight shapes (all multiples of 128).
    n1 = w1_ref.shape[1]      # W1 * C1          (256)
    n2 = w2_ref.shape[1]      # W2 * C2          (384)
    f1 = fw1_ref.shape[1]     # 256
    f2 = fw2_ref.shape[1]     # 128
    f3 = fw3_ref.shape[1]     # 128 (padded from 64)
    f4 = fw4_ref.shape[1]     # 128 (padded from 32)
    ncls = fw5_ref.shape[1]   # 128 (padded from 3)

    def chain(x):
        # x: bf16 (rows, W*CIN).  bf16 matmul operands, f32 accumulation,
        # f32 bias+tanh, bf16 handoff into the next matmul.
        h = jnp.tanh(jnp.dot(x, w1_ref[...],
                             preferred_element_type=jnp.float32)
                     + bias_ref[0:1, :n1]).astype(jnp.bfloat16)
        h = jnp.tanh(jnp.dot(h, w2_ref[...],
                             preferred_element_type=jnp.float32)
                     + bias_ref[1:2, :n2]).astype(jnp.bfloat16)
        h = jnp.tanh(jnp.dot(h, fw1_ref[...],
                             preferred_element_type=jnp.float32)
                     + bias_ref[2:3, :f1]).astype(jnp.bfloat16)
        h = jnp.tanh(jnp.dot(h, fw2_ref[...],
                             preferred_element_type=jnp.float32)
                     + bias_ref[3:4, :f2]).astype(jnp.bfloat16)
        h = jnp.tanh(jnp.dot(h, fw3_ref[...],
                             preferred_element_type=jnp.float32)
                     + bias_ref[4:5, :f3]).astype(jnp.bfloat16)
        h = jnp.tanh(jnp.dot(h, fw4_ref[...],
                             preferred_element_type=jnp.float32)
                     + bias_ref[5:6, :f4]).astype(jnp.bfloat16)
        return (jnp.dot(h, fw5_ref[...],
                        preferred_element_type=jnp.float32)
                + bias_ref[6:7, :ncls])

    tb = x_ref.shape[0]
    if tb >= 256 and tb % 16 == 0:
        # Two independent sub-chains (each half >= 128 rows): lets the
        # scheduler overlap one half's tanh/bias with the other's matmul.
        half = tb // 2
        o_ref[0:half, :] = chain(x_ref[0:half, :])
        o_ref[half:tb, :] = chain(x_ref[half:tb, :])
    else:
        o_ref[...] = chain(x_ref[...])


def _round_up(x, m):
    return ((x + m - 1) // m) * m


def _banded_conv_matrix(w_kio, in_len):
    """w_kio: (K, Cin, Cout). Returns (in_len*Cin, out_len*Cout) block-banded
    matrix M with M[(w+k)*Cin+ci, w*Cout+co] = w_kio[k, ci, co]."""
    kk, cin, cout = w_kio.shape
    out_len = in_len - (kk - 1)
    mat = jnp.zeros((in_len * cin, out_len * cout), jnp.float32)
    for w in range(out_len):
        for k in range(kk):
            mat = mat.at[(w + k) * cin:(w + k + 1) * cin,
                         w * cout:(w + 1) * cout].set(w_kio[k])
    return mat


def _pack_biases(vecs, width, rows=8):
    out = jnp.zeros((rows, width), jnp.float32)
    for i, v in enumerate(vecs):
        out = out.at[i, :v.shape[0]].set(v.astype(jnp.float32))
    return out


def prepare_eeg_encoder_params(params):
    """One-time glue: layout conversion, BN folding, lane padding, bf16 casts.

    Returns (weights_tuple_bf16, bias_pack_f32).  Call once; reuse per batch.
    """
    (w1_pt, b1_pt, w2_pt, b2_pt,
     fc_ws, fc_bs, bn_gs, bn_bs, bn_ms, bn_vs, w5_pt, b5_pt) = params

    # Spatial extents implied by the fc1 input width (flatten size).
    flat = fc_ws[0].shape[1]
    W2out = flat // C2                       # 6
    W1out = W2out + (K - 1)                  # 8
    W = W1out + (K - 1)                      # 10

    # Conv weights -> (K, Cin, Cout) taps -> block-banded matmul matrices.
    w1_k = jnp.transpose(w1_pt[:, :, 0, :], (2, 1, 0))   # (K, CIN, C1)
    w2_k = jnp.transpose(w2_pt[:, :, 0, :], (2, 1, 0))   # (K, C1, C2)
    W1BIG = _banded_conv_matrix(w1_k, W)                 # (W*CIN,  W1*C1)=(160,256)
    W2BIG = _banded_conv_matrix(w2_k, W1out)             # (W1*C1, W2*C2)=(256,384)
    b1t = jnp.tile(b1_pt, W1out)                         # bias per w*C1+c
    b2t = jnp.tile(b2_pt, W2out)                         # bias per w*C2+c

    # fc1: PyTorch flatten index is c*W2out + w; our lane flatten is w*C2 + c.
    FW1 = jnp.transpose(fc_ws[0].reshape(F1, C2, W2out),
                        (2, 1, 0)).reshape(W2out * C2, F1)   # (384, 256)
    fb1 = fc_bs[0]

    # Eval-mode BatchNorm affines s,t folded into the *next* linear layer.
    scales, shifts = [], []
    for g, bb, m, v in zip(bn_gs, bn_bs, bn_ms, bn_vs):
        sc = g / jnp.sqrt(v + BN_EPS)
        scales.append(sc)
        shifts.append(bb - m * sc)

    FW2 = scales[0][:, None] * fc_ws[1].T                # (F1, F2) = (256,128)
    fb2 = fc_bs[1] + shifts[0] @ fc_ws[1].T
    FW3 = scales[1][:, None] * fc_ws[2].T                # (F2, F3) = (128, 64)
    fb3 = fc_bs[2] + shifts[1] @ fc_ws[2].T
    FW4 = scales[2][:, None] * fc_ws[3].T                # (F3, F4) = (64, 32)
    fb4 = fc_bs[3] + shifts[2] @ fc_ws[3].T
    FW5 = scales[3][:, None] * w5_pt.T                   # (F4, NCLS) = (32, 3)
    fb5 = b5_pt + shifts[3] @ w5_pt.T

    # Lane-dense padding of the narrow tail layers to 128 lanes (exact: padded
    # weight cols/rows and biases are zero -> padded activations are tanh(0)=0).
    FW3p = jnp.zeros((F2, NPAD), jnp.float32).at[:, :F3].set(FW3)
    FW4p = jnp.zeros((NPAD, NPAD), jnp.float32).at[:F3, :F4].set(FW4)
    FW5p = jnp.zeros((NPAD, NPAD), jnp.float32).at[:F4, :NCLS].set(FW5)
    fb3p = jnp.zeros((NPAD,), jnp.float32).at[:F3].set(fb3)
    fb4p = jnp.zeros((NPAD,), jnp.float32).at[:F4].set(fb4)
    fb5p = jnp.zeros((NPAD,), jnp.float32).at[:NCLS].set(fb5)

    # All bias slices are now multiples of 128 lanes.
    bias_pack = _pack_biases([b1t, b2t, fb1, fb2, fb3p, fb4p, fb5p],
                             width=max(W1out * C1, W2out * C2, F1))

    weights = tuple(w.astype(jnp.bfloat16)
                    for w in (W1BIG, W2BIG, FW1, FW2, FW3p, FW4p, FW5p))
    return weights, bias_pack


def eeg_encoder_apply(x_nchw, prepped, *, batch_tile=1024):
    """x_nchw: (B, 16, 1, W) float32; returns (B, 3) float32."""
    weights, bias_pack = prepped
    B, C, H, W = x_nchw.shape
    assert C == CIN and H == 1, "this setup uses 16 channels, H=1"

    # Input in lane-flattened NWC order (index w*CIN + ci), bf16 for the MXU.
    x_lane = jnp.transpose(x_nchw[:, :, 0, :], (0, 2, 1)).reshape(B, W * CIN)
    x_lane = x_lane.astype(jnp.bfloat16)

    # Batch tile: multiple of 8, capped by batch_tile, and chosen so the grid
    # has >= 2 steps (lets the "parallel" axis shard across v7x's two TCs).
    TB = max(8, min(batch_tile, _round_up(pl.cdiv(B, 2), 8)))
    Bp = max(_round_up(B, TB), 2 * TB)
    pad = Bp - B
    if pad:
        x_lane = jnp.concatenate(
            [x_lane, jnp.zeros((pad, x_lane.shape[1]), x_lane.dtype)], axis=0)
    grid = (Bp // TB,)

    in_specs = [pl.BlockSpec((TB, x_lane.shape[1]), lambda i: (i, 0))]
    in_specs += [pl.BlockSpec(w.shape, lambda i: (0, 0)) for w in weights]
    in_specs += [pl.BlockSpec(bias_pack.shape, lambda i: (0, 0))]

    out = pl.pallas_call(
        eeg_encoder_kernel,
        out_shape=jax.ShapeDtypeStruct((Bp, NPAD), jnp.float32),
        grid=grid,
        in_specs=in_specs,
        out_specs=pl.BlockSpec((TB, NPAD), lambda i: (i, 0)),
        compiler_params=pltpu.CompilerParams(
            dimension_semantics=("parallel",)),
    )(x_lane, *weights, bias_pack)
    return out[:B, :NCLS]


def eeg_encoder_forward(x_nchw, params, *, batch_tile=1024):
    """Convenience wrapper: prepare (glue) + apply. Prefer calling
    prepare_eeg_encoder_params once and reusing `prepped` for many batches."""
    prepped = prepare_eeg_encoder_params(params)
    return eeg_encoder_apply(x_nchw, prepped, batch_tile=batch_tile)


def ref_forward(x, params):
    """Pure-JAX f32 reference with PyTorch NCHW semantics (eval mode)."""
    (w1_pt, b1_pt, w2_pt, b2_pt,
     fc_ws, fc_bs, bn_gs, bn_bs, bn_ms, bn_vs, w5_pt, b5_pt) = params

    def conv1x3(x, w, b):
        cout, cin, _, kk = w.shape
        wout = x.shape[3] - kk + 1
        out = jnp.zeros((x.shape[0], cout, x.shape[2], wout), jnp.float32)
        for k in range(kk):
            out = out + jnp.einsum('bchw,oc->bohw',
                                   x[:, :, :, k:k + wout], w[:, :, 0, k])
        return out + b[None, :, None, None]

    h = jnp.tanh(conv1x3(x, w1_pt, b1_pt))
    h = jnp.tanh(conv1x3(h, w2_pt, b2_pt))
    f = h.reshape(h.shape[0], -1)                         # flatten(start_dim=1)
    for Wf, bf, g, bb, m, v in zip(fc_ws, fc_bs, bn_gs, bn_bs, bn_ms, bn_vs):
        f = jnp.tanh(f @ Wf.T + bf)                       # Dropout = identity (eval)
        f = g * (f - m) / jnp.sqrt(v + BN_EPS) + bb       # BatchNorm1d (eval)
    return f @ w5_pt.T + b5_pt


if __name__ == "__main__":
    key = jax.random.PRNGKey(0)
    ks = jax.random.split(key, 32)

    # input: (B, 16, 1, 10) -> after two valid (1,3) convs: (B, 64, 1, 6) -> 384
    B, H, W = 2, 1, 10
    x = jax.random.normal(ks[0], (B, CIN, H, W), jnp.float32)

    w1_pt = 0.1 * jax.random.normal(ks[1], (C1, CIN, 1, K), jnp.float32)
    b1_pt = 0.1 * jax.random.normal(ks[2], (C1,), jnp.float32)
    w2_pt = 0.1 * jax.random.normal(ks[3], (C2, C1, 1, K), jnp.float32)
    b2_pt = 0.1 * jax.random.normal(ks[4], (C2,), jnp.float32)

    dims = [(F1, C2 * H * (W - 4)), (F2, F1), (F3, F2), (F4, F3)]
    fc_ws, fc_bs, bn_gs, bn_bs, bn_ms, bn_vs = [], [], [], [], [], []
    i = 5
    for dout, din in dims:
        fc_ws.append(0.1 * jax.random.normal(ks[i], (dout, din), jnp.float32)); i += 1
        fc_bs.append(0.1 * jax.random.normal(ks[i], (dout,), jnp.float32)); i += 1
        bn_gs.append(1.0 + 0.1 * jax.random.normal(ks[i], (dout,), jnp.float32)); i += 1
        bn_bs.append(0.1 * jax.random.normal(ks[i], (dout,), jnp.float32)); i += 1
        bn_ms.append(0.1 * jax.random.normal(ks[i], (dout,), jnp.float32)); i += 1
        bn_vs.append(0.5 + jax.random.uniform(ks[i], (dout,), jnp.float32)); i += 1
    w5_pt = 0.1 * jax.random.normal(ks[i], (NCLS, F4), jnp.float32); i += 1
    b5_pt = 0.1 * jax.random.normal(ks[i], (NCLS,), jnp.float32)

    params = (w1_pt, b1_pt, w2_pt, b2_pt,
              fc_ws, fc_bs, bn_gs, bn_bs, bn_ms, bn_vs, w5_pt, b5_pt)

    # Glue hoisted out of the hot path: prepare once, apply (jitted) per batch.
    prepped = jax.block_until_ready(prepare_eeg_encoder_params(params))
    fwd = jax.jit(lambda xx: eeg_encoder_apply(xx, prepped))

    out = jax.block_until_ready(fwd(x))
    ref = jax.block_until_ready(ref_forward(x, params))

    assert out.shape == (B, NCLS)
    # bf16 matmul operands through 7 layers -> relaxed tolerance vs f32 ref.
    assert jnp.allclose(out, ref, atol=5e-2, rtol=5e-2), (out, ref)
    print("KERNEL_OK")
</pallas_src>

<mosaic_0001>
module attributes {stable_mosaic.version = 11 : i64} {
  func.func @eeg_encoder_kernel(%arg0: i32, %arg1: memref<8x160xbf16, #tpu.memory_space<vmem>>, %arg2: memref<160x256xbf16, #tpu.memory_space<vmem>>, %arg3: memref<256x384xbf16, #tpu.memory_space<vmem>>, %arg4: memref<384x256xbf16, #tpu.memory_space<vmem>>, %arg5: memref<256x128xbf16, #tpu.memory_space<vmem>>, %arg6: memref<128x128xbf16, #tpu.memory_space<vmem>>, %arg7: memref<128x128xbf16, #tpu.memory_space<vmem>>, %arg8: memref<128x128xbf16, #tpu.memory_space<vmem>>, %arg9: memref<8x384xf32, #tpu.memory_space<vmem>>, %arg10: memref<8x128xf32, #tpu.memory_space<vmem>>) attributes {dimension_semantics = [#tpu.dimension_semantics<parallel>], iteration_bounds = array<i64: 2>, scalar_prefetch = 0 : i64, scratch_operands = 0 : i64, tpu.core_type = #tpu.core_type<tc>, window_params = [{transform_indices = @transform_0, window_bounds = array<i64: 8, 160>}, {pipeline_mode = #tpu.pipeline_mode<synchronous>, transform_indices = @transform_1, window_bounds = array<i64: 160, 256>}, {pipeline_mode = #tpu.pipeline_mode<synchronous>, transform_indices = @transform_2, window_bounds = array<i64: 256, 384>}, {pipeline_mode = #tpu.pipeline_mode<synchronous>, transform_indices = @transform_3, window_bounds = array<i64: 384, 256>}, {pipeline_mode = #tpu.pipeline_mode<synchronous>, transform_indices = @transform_4, window_bounds = array<i64: 256, 128>}, {pipeline_mode = #tpu.pipeline_mode<synchronous>, transform_indices = @transform_5, window_bounds = array<i64: 128, 128>}, {pipeline_mode = #tpu.pipeline_mode<synchronous>, transform_indices = @transform_6, window_bounds = array<i64: 128, 128>}, {pipeline_mode = #tpu.pipeline_mode<synchronous>, transform_indices = @transform_7, window_bounds = array<i64: 128, 128>}, {pipeline_mode = #tpu.pipeline_mode<synchronous>, transform_indices = @transform_8, window_bounds = array<i64: 8, 384>}, {transform_indices = @transform_9, window_bounds = array<i64: 8, 128>}]} {
    %c0 = arith.constant 0 : index
    %c0_0 = arith.constant 0 : index
    %0 = vector.load %arg1[%c0, %c0_0] : memref<8x160xbf16, #tpu.memory_space<vmem>>, vector<8x160xbf16>
    %c0_1 = arith.constant 0 : index
    %c0_2 = arith.constant 0 : index
    %1 = vector.load %arg2[%c0_1, %c0_2] : memref<160x256xbf16, #tpu.memory_space<vmem>>, vector<160x256xbf16>
    %cst = arith.constant dense<0.000000e+00> : vector<8x256xf32>
    %2 = tpu.matmul %0, %1, %cst {dimension_numbers = #tpu.dot_dimension_numbers<[1], [0], [0], [1], [0, 0, 1, 1], [], []>} : vector<8x160xbf16>, vector<160x256xbf16>, vector<8x256xf32> -> vector<8x256xf32>
    %c0_3 = arith.constant 0 : index
    %c0_4 = arith.constant 0 : index
    %3 = vector.load %arg9[%c0_3, %c0_4] : memref<8x384xf32, #tpu.memory_space<vmem>>, vector<1x256xf32>
    %4 = vector.broadcast %3 : vector<1x256xf32> to vector<8x256xf32>
    %5 = arith.addf %2, %4 : vector<8x256xf32>
    %6 = math.tanh %5 : vector<8x256xf32>
    %7 = arith.truncf %6 : vector<8x256xf32> to vector<8x256xbf16>
    %c0_5 = arith.constant 0 : index
    %c0_6 = arith.constant 0 : index
    %8 = vector.load %arg3[%c0_5, %c0_6] : memref<256x384xbf16, #tpu.memory_space<vmem>>, vector<256x384xbf16>
    %cst_7 = arith.constant dense<0.000000e+00> : vector<8x384xf32>
    %9 = tpu.matmul %7, %8, %cst_7 {dimension_numbers = #tpu.dot_dimension_numbers<[1], [0], [0], [1], [0, 0, 1, 1], [], []>} : vector<8x256xbf16>, vector<256x384xbf16>, vector<8x384xf32> -> vector<8x384xf32>
    %c1 = arith.constant 1 : index
    %c0_8 = arith.constant 0 : index
    %10 = vector.load %arg9[%c1, %c0_8] : memref<8x384xf32, #tpu.memory_space<vmem>>, vector<1x384xf32>
    %11 = vector.broadcast %10 : vector<1x384xf32> to vector<8x384xf32>
    %12 = arith.addf %9, %11 : vector<8x384xf32>
    %13 = math.tanh %12 : vector<8x384xf32>
    %14 = arith.truncf %13 : vector<8x384xf32> to vector<8x384xbf16>
    %c0_9 = arith.constant 0 : index
    %c0_10 = arith.constant 0 : index
    %15 = vector.load %arg4[%c0_9, %c0_10] : memref<384x256xbf16, #tpu.memory_space<vmem>>, vector<384x256xbf16>
    %cst_11 = arith.constant dense<0.000000e+00> : vector<8x256xf32>
    %16 = tpu.matmul %14, %15, %cst_11 {dimension_numbers = #tpu.dot_dimension_numbers<[1], [0], [0], [1], [0, 0, 1, 1], [], []>} : vector<8x384xbf16>, vector<384x256xbf16>, vector<8x256xf32> -> vector<8x256xf32>
    %c2 = arith.constant 2 : index
    %c0_12 = arith.constant 0 : index
    %17 = vector.load %arg9[%c2, %c0_12] : memref<8x384xf32, #tpu.memory_space<vmem>>, vector<1x256xf32>
    %18 = vector.broadcast %17 : vector<1x256xf32> to vector<8x256xf32>
    %19 = arith.addf %16, %18 : vector<8x256xf32>
    %20 = math.tanh %19 : vector<8x256xf32>
    %21 = arith.truncf %20 : vector<8x256xf32> to vector<8x256xbf16>
    %c0_13 = arith.constant 0 : index
    %c0_14 = arith.constant 0 : index
    %22 = vector.load %arg5[%c0_13, %c0_14] : memref<256x128xbf16, #tpu.memory_space<vmem>>, vector<256x128xbf16>
    %cst_15 = arith.constant dense<0.000000e+00> : vector<8x128xf32>
    %23 = tpu.matmul %21, %22, %cst_15 {dimension_numbers = #tpu.dot_dimension_numbers<[1], [0], [0], [1], [0, 0, 1, 1], [], []>} : vector<8x256xbf16>, vector<256x128xbf16>, vector<8x128xf32> -> vector<8x128xf32>
    %c3 = arith.constant 3 : index
    %c0_16 = arith.constant 0 : index
    %24 = vector.load %arg9[%c3, %c0_16] : memref<8x384xf32, #tpu.memory_space<vmem>>, vector<1x128xf32>
    %25 = vector.broadcast %24 : vector<1x128xf32> to vector<8x128xf32>
    %26 = arith.addf %23, %25 : vector<8x128xf32>
    %27 = math.tanh %26 : vector<8x128xf32>
    %28 = arith.truncf %27 : vector<8x128xf32> to vector<8x128xbf16>
    %c0_17 = arith.constant 0 : index
    %c0_18 = arith.constant 0 : index
    %29 = vector.load %arg6[%c0_17, %c0_18] : memref<128x128xbf16, #tpu.memory_space<vmem>>, vector<128x128xbf16>
    %cst_19 = arith.constant dense<0.000000e+00> : vector<8x128xf32>
    %30 = tpu.matmul %28, %29, %cst_19 {dimension_numbers = #tpu.dot_dimension_numbers<[1], [0], [0], [1], [0, 0, 1, 1], [], []>} : vector<8x128xbf16>, vector<128x128xbf16>, vector<8x128xf32> -> vector<8x128xf32>
    %c4 = arith.constant 4 : index
    %c0_20 = arith.constant 0 : index
    %31 = vector.load %arg9[%c4, %c0_20] : memref<8x384xf32, #tpu.memory_space<vmem>>, vector<1x128xf32>
    %32 = vector.broadcast %31 : vector<1x128xf32> to vector<8x128xf32>
    %33 = arith.addf %30, %32 : vector<8x128xf32>
    %34 = math.tanh %33 : vector<8x128xf32>
    %35 = arith.truncf %34 : vector<8x128xf32> to vector<8x128xbf16>
    %c0_21 = arith.constant 0 : index
    %c0_22 = arith.constant 0 : index
    %36 = vector.load %arg7[%c0_21, %c0_22] : memref<128x128xbf16, #tpu.memory_space<vmem>>, vector<128x128xbf16>
    %cst_23 = arith.constant dense<0.000000e+00> : vector<8x128xf32>
    %37 = tpu.matmul %35, %36, %cst_23 {dimension_numbers = #tpu.dot_dimension_numbers<[1], [0], [0], [1], [0, 0, 1, 1], [], []>} : vector<8x128xbf16>, vector<128x128xbf16>, vector<8x128xf32> -> vector<8x128xf32>
    %c5 = arith.constant 5 : index
    %c0_24 = arith.constant 0 : index
    %38 = vector.load %arg9[%c5, %c0_24] : memref<8x384xf32, #tpu.memory_space<vmem>>, vector<1x128xf32>
    %39 = vector.broadcast %38 : vector<1x128xf32> to vector<8x128xf32>
    %40 = arith.addf %37, %39 : vector<8x128xf32>
    %41 = math.tanh %40 : vector<8x128xf32>
    %42 = arith.truncf %41 : vector<8x128xf32> to vector<8x128xbf16>
    %c0_25 = arith.constant 0 : index
    %c0_26 = arith.constant 0 : index
    %43 = vector.load %arg8[%c0_25, %c0_26] : memref<128x128xbf16, #tpu.memory_space<vmem>>, vector<128x128xbf16>
    %cst_27 = arith.constant dense<0.000000e+00> : vector<8x128xf32>
    %44 = tpu.matmul %42, %43, %cst_27 {dimension_numbers = #tpu.dot_dimension_numbers<[1], [0], [0], [1], [0, 0, 1, 1], [], []>} : vector<8x128xbf16>, vector<128x128xbf16>, vector<8x128xf32> -> vector<8x128xf32>
    %c6 = arith.constant 6 : index
    %c0_28 = arith.constant 0 : index
    %45 = vector.load %arg9[%c6, %c0_28] : memref<8x384xf32, #tpu.memory_space<vmem>>, vector<1x128xf32>
    %46 = vector.broadcast %45 : vector<1x128xf32> to vector<8x128xf32>
    %47 = arith.addf %44, %46 : vector<8x128xf32>
    %c0_29 = arith.constant 0 : index
    %c0_30 = arith.constant 0 : index
    %48 = vector.load %arg10[%c0_29, %c0_30] : memref<8x128xf32, #tpu.memory_space<vmem>>, vector<8x128xf32>
    tpu.vector_store %arg10[%c0_29, %c0_30], %47 {strides = array<i32>} : memref<8x128xf32, #tpu.memory_space<vmem>>, vector<8x128xf32>,
    return
  }
  func.func @transform_0(%arg0: i32) -> (i32, i32) {
    %c0_i32 = arith.constant 0 : i32
    %c0_i32_0 = arith.constant 0 : i32
    return %arg0, %c0_i32 : i32, i32
  }
  func.func @transform_1(%arg0: i32) -> (i32, i32) {
    %c0_i32 = arith.constant 0 : i32
    %c0_i32_0 = arith.constant 0 : i32
    %c0_i32_1 = arith.constant 0 : i32
    return %c0_i32, %c0_i32_0 : i32, i32
  }
  func.func @transform_2(%arg0: i32) -> (i32, i32) {
    %c0_i32 = arith.constant 0 : i32
    %c0_i32_0 = arith.constant 0 : i32
    %c0_i32_1 = arith.constant 0 : i32
    return %c0_i32, %c0_i32_0 : i32, i32
  }
  func.func @transform_3(%arg0: i32) -> (i32, i32) {
    %c0_i32 = arith.constant 0 : i32
    %c0_i32_0 = arith.constant 0 : i32
    %c0_i32_1 = arith.constant 0 : i32
    return %c0_i32, %c0_i32_0 : i32, i32
  }
  func.func @transform_4(%arg0: i32) -> (i32, i32) {
    %c0_i32 = arith.constant 0 : i32
    %c0_i32_0 = arith.constant 0 : i32
    %c0_i32_1 = arith.constant 0 : i32
    return %c0_i32, %c0_i32_0 : i32, i32
  }
  func.func @transform_5(%arg0: i32) -> (i32, i32) {
    %c0_i32 = arith.constant 0 : i32
    %c0_i32_0 = arith.constant 0 : i32
    %c0_i32_1 = arith.constant 0 : i32
    return %c0_i32, %c0_i32_0 : i32, i32
  }
  func.func @transform_6(%arg0: i32) -> (i32, i32) {
    %c0_i32 = arith.constant 0 : i32
    %c0_i32_0 = arith.constant 0 : i32
    %c0_i32_1 = arith.constant 0 : i32
    return %c0_i32, %c0_i32_0 : i32, i32
  }
  func.func @transform_7(%arg0: i32) -> (i32, i32) {
    %c0_i32 = arith.constant 0 : i32
    %c0_i32_0 = arith.constant 0 : i32
    %c0_i32_1 = arith.constant 0 : i32
    return %c0_i32, %c0_i32_0 : i32, i32
  }
  func.func @transform_8(%arg0: i32) -> (i32, i32) {
    %c0_i32 = arith.constant 0 : i32
    %c0_i32_0 = arith.constant 0 : i32
    %c0_i32_1 = arith.constant 0 : i32
    return %c0_i32, %c0_i32_0 : i32, i32
  }
  func.func @transform_9(%arg0: i32) -> (i32, i32) {
    %c0_i32 = arith.constant 0 : i32
    %c0_i32_0 = arith.constant 0 : i32
    return %arg0, %c0_i32 : i32, i32
  }
}

</mosaic_0001>

<llo_original>
// kernel: _lambda_.1
$region0: #{_lambda_.1}
  #allocation0 [shape = 'u32[]', space=smem, size = 0x4, offset = 0x4, fixed_abs, tag = 'smem constant byte address 0x4 - core index']
  #allocation1 [shape = 'u32[72,128]{1,0:T(1,128)}', space=vmem, size = 0x9000, scoped, tag = 'internal scratch']
  %s0 = inlined_call_operand.vmem [shape: bf16[16,160], index: 0, kind: input, shape index: {}]
  %s1 = inlined_call_operand.hbm [shape: bf16[160,256], index: 1, kind: input, shape index: {}]
  %s2 = inlined_call_operand.hbm [shape: bf16[256,384], index: 2, kind: input, shape index: {}]
  %s3 = inlined_call_operand.hbm [shape: bf16[384,256], index: 3, kind: input, shape index: {}]
  %s4 = inlined_call_operand.vmem [shape: bf16[256,128], index: 4, kind: input, shape index: {}]
  %s5 = inlined_call_operand.hbm [shape: bf16[128,128], index: 5, kind: input, shape index: {}]
  %s6 = inlined_call_operand.hbm [shape: bf16[128,128], index: 6, kind: input, shape index: {}]
  %s7 = inlined_call_operand.hbm [shape: bf16[128,128], index: 7, kind: input, shape index: {}]
  %s8 = inlined_call_operand.hbm [shape: f32[8,384], index: 8, kind: input, shape index: {}]
  %s9 = inlined_call_operand.vmem [shape: f32[16,128], index: 9, kind: output, shape index: {}]
  %s10 = sld [smem:[#allocation0]]
  $region97: #{_lambda_.1} parent=0
    _
  %s12 = ssub.s32 1, %s10
  %s13 = scalar_select 0, %s12, %s10
  $region1: #{_lambda_.1} parent=0
    #allocation2 [shape = 'u8[81920]{0}', space=vmem, size = 0x14000, scoped, tag = 'input window, operand 1, single buffered']
    #allocation3 [shape = 's32[2]{0}', space=sflag, size = 0x8, scoped, tag = 'scoped memory for _lambda_.1']
    #allocation4 [shape = 'u8[196608]{0}', space=vmem, size = 0x30000, scoped, tag = 'input window, operand 2, single buffered']
    #allocation5 [shape = 's32[1]{0}', space=sflag, size = 0x4, scoped, tag = 'scoped memory for _lambda_.1']
    #allocation6 [shape = 'u8[196608]{0}', space=vmem, size = 0x30000, scoped, tag = 'input window, operand 3, single buffered']
    #allocation7 [shape = 'u8[32768]{0}', space=vmem, size = 0x8000, scoped, tag = 'input window, operand 5, single buffered']
    #allocation8 [shape = 's32[1]{0}', space=sflag, size = 0x4, scoped, tag = 'scoped memory for _lambda_.1']
    #allocation9 [shape = 'u8[32768]{0}', space=vmem, size = 0x8000, scoped, tag = 'input window, operand 6, single buffered']
    #allocation10 [shape = 'u8[32768]{0}', space=vmem, size = 0x8000, scoped, tag = 'input window, operand 7, single buffered']
    #allocation11 [shape = 's32[1]{0}', space=sflag, size = 0x4, scoped, tag = 'scoped memory for _lambda_.1']
    #allocation12 [shape = 'u8[12288]{0}', space=vmem, size = 0x3000, scoped, tag = 'input window, operand 8, single buffered']
    %14 = vsyncpa [#allocation3], 0
    %15 = vsyncpa [#allocation5], 0
    %16 = vsyncpa [#allocation8], 0
    %17 = vsyncpa [#allocation11], 0
    loop: start=0, step=1, limit=4
    $region2: #{_lambda_.1} parent=1 // loop_pre_header
      _
    $region3: #{_lambda_.1} parent=1 // loop_header
      %s19 = sphi 0, %s23
      %p20 = scmp.ge.s32.totalorder %s19, 4
      %s29 = sphi 0, %s31
      %s32 = sphi 0, %s29
      %s33 = sphi 0, %s32
      %s49 = sphi 0, %s33
      %s53 = sphi 0, %s53
      %s55 = sphi 0, %s53
      %s56 = sphi 0, %s55
      %s70 = sphi 0, %s56
      %s74 = sphi 0, %s74
      %s76 = sphi 0, %s74
      %s77 = sphi 0, %s76
      %s91 = sphi 0, %s77
      %s95 = sphi 0, %s95
      %s97 = sphi 0, %s95
      %s98 = sphi 0, %s97
      %s112 = sphi 0, %s98
      %s116 = sphi 0, %s116
      %s118 = sphi 0, %s116
      %s119 = sphi 0, %s118
      %s133 = sphi 0, %s119
      %s137 = sphi 0, %s137
      %s139 = sphi 0, %s137
      %s140 = sphi 0, %s139
      %s154 = sphi 0, %s140
      %s158 = sphi 0, %s158
      %s160 = sphi 0, %s158
      %s161 = sphi 0, %s160
      %s175 = sphi 0, %s161
      %s179 = sphi 0, %s179
      %s181 = sphi 0, %s179
      %s182 = sphi 0, %s181
      %s196 = sphi 0, %s182
      %s200 = sphi 0, %s200
      %s202 = sphi 0, %s200
      %s203 = sphi 0, %s202
      %s217 = sphi 0, %s203
      %s223 = sphi 0, %s225
      %s226 = sphi 0, %s223
      %s227 = sphi 0, %s226
      %s243 = sphi 0, %s227
    $region4: #{_lambda_.1} parent=1 // loop_header_branch
      %22 = sbr.rel (%p20) target = $region8
    $region5: #{_lambda_.1} parent=1 // loop_body
      %s24 = ssub.s32 %s19, 1
      %s25 = ssub.s32 %s19, 2
      %s26 = sadd.s32 %s19, 1
      %s27 = ssub.s32 %s19, %s26
      %p28 = scmp.eq.s32.totalorder %s27, 0
      %s30 = sadd.s32 %s29, 1
      %s31 = scalar_select %p28, %s29, %s30
      %p34 = pneg %p28
      %p35 = scmp.eq.s32.totalorder %s19, 1
      %p36 = por %p34, %p35
      %p37 = scmp.ne.s32.totalorder %s29, %s32
      %p38 = scmp.eq.s32.totalorder %s19, 0
      %p39 = por %p37, %p38
      %p40 = scmp.ne.s32.totalorder %s29, %s32
      %p41 = scmp.eq.s32.totalorder %s24, 1
      %p42 = por %p40, %p41
      %p43 = scmp.ne.s32.totalorder %s32, %s33
      %p44 = scmp.eq.s32.totalorder %s24, 0
      %p45 = por %p43, %p44
      %p46 = scmp.ne.s32.totalorder %s32, %s33
      %p47 = scmp.eq.s32.totalorder %s25, 1
      %p48 = por %p46, %p47
      %p50 = scmp.ne.s32.totalorder %s33, %s49
      %p51 = scmp.eq.s32.totalorder %s25, 0
      %p52 = por %p50, %p51
      %s54 = sadd.s32 %s53, 1
      %p57 = scmp.eq.s32.totalorder %s19, 1
      %p58 = scmp.ne.s32.totalorder %s53, %s55
      %p59 = scmp.eq.s32.totalorder %s19, 0
      %p60 = por %p58, %p59
      %p61 = scmp.ne.s32.totalorder %s53, %s55
      %p62 = scmp.eq.s32.totalorder %s24, 1
      %p63 = por %p61, %p62
      %p64 = scmp.ne.s32.totalorder %s55, %s56
      %p65 = scmp.eq.s32.totalorder %s24, 0
      %p66 = por %p64, %p65
      %p67 = scmp.ne.s32.totalorder %s55, %s56
      %p68 = scmp.eq.s32.totalorder %s25, 1
      %p69 = por %p67, %p68
      %p71 = scmp.ne.s32.totalorder %s56, %s70
      %p72 = scmp.eq.s32.totalorder %s25, 0
      %p73 = por %p71, %p72
      %s75 = sadd.s32 %s74, 1
      %p78 = scmp.eq.s32.totalorder %s19, 1
      %p79 = scmp.ne.s32.totalorder %s74, %s76
      %p80 = scmp.eq.s32.totalorder %s19, 0
      %p81 = por %p79, %p80
      %p82 = scmp.ne.s32.totalorder %s74, %s76
      %p83 = scmp.eq.s32.totalorder %s24, 1
      %p84 = por %p82, %p83
      %p85 = scmp.ne.s32.totalorder %s76, %s77
      %p86 = scmp.eq.s32.totalorder %s24, 0
      %p87 = por %p85, %p86
      %p88 = scmp.ne.s32.totalorder %s76, %s77
      %p89 = scmp.eq.s32.totalorder %s25, 1
      %p90 = por %p88, %p89
      %p92 = scmp.ne.s32.totalorder %s77, %s91
      %p93 = scmp.eq.s32.totalorder %s25, 0
      %p94 = por %p92, %p93
      %s96 = sadd.s32 %s95, 1
      %p99 = scmp.eq.s32.totalorder %s19, 1
      %p100 = scmp.ne.s32.totalorder %s95, %s97
      %p101 = scmp.eq.s32.totalorder %s19, 0
      %p102 = por %p100, %p101
      %p103 = scmp.ne.s32.totalorder %s95, %s97
      %p104 = scmp.eq.s32.totalorder %s24, 1
      %p105 = por %p103, %p104
      %p106 = scmp.ne.s32.totalorder %s97, %s98
      %p107 = scmp.eq.s32.totalorder %s24, 0
      %p108 = por %p106, %p107
      %p109 = scmp.ne.s32.totalorder %s97, %s98
      %p110 = scmp.eq.s32.totalorder %s25, 1
      %p111 = por %p109, %p110
      %p113 = scmp.ne.s32.totalorder %s98, %s112
      %p114 = scmp.eq.s32.totalorder %s25, 0
      %p115 = por %p113, %p114
      %s117 = sadd.s32 %s116, 1
      %p120 = scmp.eq.s32.totalorder %s19, 1
      %p121 = scmp.ne.s32.totalorder %s116, %s118
      %p122 = scmp.eq.s32.totalorder %s19, 0
      %p123 = por %p121, %p122
      %p124 = scmp.ne.s32.totalorder %s116, %s118
      %p125 = scmp.eq.s32.totalorder %s24, 1
      %p126 = por %p124, %p125
      %p127 = scmp.ne.s32.totalorder %s118, %s119
      %p128 = scmp.eq.s32.totalorder %s24, 0
      %p129 = por %p127, %p128
      %p130 = scmp.ne.s32.totalorder %s118, %s119
      %p131 = scmp.eq.s32.totalorder %s25, 1
      %p132 = por %p130, %p131
      %p134 = scmp.ne.s32.totalorder %s119, %s133
      %p135 = scmp.eq.s32.totalorder %s25, 0
      %p136 = por %p134, %p135
      %s138 = sadd.s32 %s137, 1
      %p141 = scmp.eq.s32.totalorder %s19, 1
      %p142 = scmp.ne.s32.totalorder %s137, %s139
      %p143 = scmp.eq.s32.totalorder %s19, 0
      %p144 = por %p142, %p143
      %p145 = scmp.ne.s32.totalorder %s137, %s139
      %p146 = scmp.eq.s32.totalorder %s24, 1
      %p147 = por %p145, %p146
      %p148 = scmp.ne.s32.totalorder %s139, %s140
      %p149 = scmp.eq.s32.totalorder %s24, 0
      %p150 = por %p148, %p149
      %p151 = scmp.ne.s32.totalorder %s139, %s140
      %p152 = scmp.eq.s32.totalorder %s25, 1
      %p153 = por %p151, %p152
      %p155 = scmp.ne.s32.totalorder %s140, %s154
      %p156 = scmp.eq.s32.totalorder %s25, 0
      %p157 = por %p155, %p156
      %s159 = sadd.s32 %s158, 1
      %p162 = scmp.eq.s32.totalorder %s19, 1
      %p163 = scmp.ne.s32.totalorder %s158, %s160
      %p164 = scmp.eq.s32.totalorder %s19, 0
      %p165 = por %p163, %p164
      %p166 = scmp.ne.s32.totalorder %s158, %s160
      %p167 = scmp.eq.s32.totalorder %s24, 1
      %p168 = por %p166, %p167
      %p169 = scmp.ne.s32.totalorder %s160, %s161
      %p170 = scmp.eq.s32.totalorder %s24, 0
      %p171 = por %p169, %p170
      %p172 = scmp.ne.s32.totalorder %s160, %s161
      %p173 = scmp.eq.s32.totalorder %s25, 1
      %p174 = por %p172, %p173
      %p176 = scmp.ne.s32.totalorder %s161, %s175
      %p177 = scmp.eq.s32.totalorder %s25, 0
      %p178 = por %p176, %p177
      %s180 = sadd.s32 %s179, 1
      %p183 = scmp.eq.s32.totalorder %s19, 1
      %p184 = scmp.ne.s32.totalorder %s179, %s181
      %p185 = scmp.eq.s32.totalorder %s19, 0
      %p186 = por %p184, %p185
      %p187 = scmp.ne.s32.totalorder %s179, %s181
      %p188 = scmp.eq.s32.totalorder %s24, 1
      %p189 = por %p187, %p188
      %p190 = scmp.ne.s32.totalorder %s181, %s182
      %p191 = scmp.eq.s32.totalorder %s24, 0
      %p192 = por %p190, %p191
      %p193 = scmp.ne.s32.totalorder %s181, %s182
      %p194 = scmp.eq.s32.totalorder %s25, 1
      %p195 = por %p193, %p194
      %p197 = scmp.ne.s32.totalorder %s182, %s196
      %p198 = scmp.eq.s32.totalorder %s25, 0
      %p199 = por %p197, %p198
      %s201 = sadd.s32 %s200, 1
      %p204 = scmp.eq.s32.totalorder %s19, 1
      %p205 = scmp.ne.s32.totalorder %s200, %s202
      %p206 = scmp.eq.s32.totalorder %s19, 0
      %p207 = por %p205, %p206
      %p208 = scmp.ne.s32.totalorder %s200, %s202
      %p209 = scmp.eq.s32.totalorder %s24, 1
      %p210 = por %p208, %p209
      %p211 = scmp.ne.s32.totalorder %s202, %s203
      %p212 = scmp.eq.s32.totalorder %s24, 0
      %p213 = por %p211, %p212
      %p214 = scmp.ne.s32.totalorder %s202, %s203
      %p215 = scmp.eq.s32.totalorder %s25, 1
      %p216 = por %p214, %p215
      %p218 = scmp.ne.s32.totalorder %s203, %s217
      %p219 = scmp.eq.s32.totalorder %s25, 0
      %p220 = por %p218, %p219
      %s221 = ssub.s32 %s19, %s26
      %p222 = scmp.eq.s32.totalorder %s221, 0
      %s224 = sadd.s32 %s223, 1
      %s225 = scalar_select %p222, %s223, %s224
      %p228 = pneg %p222
      %p229 = scmp.eq.s32.totalorder %s19, 1
      %p230 = por %p228, %p229
      %p231 = scmp.ne.s32.totalorder %s223, %s226
      %p232 = scmp.eq.s32.totalorder %s19, 0
      %p233 = por %p231, %p232
      %p234 = scmp.ne.s32.totalorder %s223, %s226
      %p235 = scmp.eq.s32.totalorder %s24, 1
      %p236 = por %p234, %p235
      %p237 = scmp.ne.s32.totalorder %s226, %s227
      %p238 = scmp.eq.s32.totalorder %s24, 0
      %p239 = por %p237, %p238
      %p240 = scmp.ne.s32.totalorder %s226, %s227
      %p241 = scmp.eq.s32.totalorder %s25, 1
      %p242 = por %p240, %p241
      %p244 = scmp.ne.s32.totalorder %s227, %s243
      %p245 = scmp.eq.s32.totalorder %s25, 0
      %p246 = por %p244, %p245
      %p247 = scmp.le.s32.totalorder 1, %s19
      %p248 = scmp.lt.s32.totalorder %s19, 3
      %p249 = pnand %p247, %p248
      %p250 = pneg %p249
      // Predicated region
      $region9: #{_lambda_.1} parent=5 // pred_check
        _
      $region10: #{_lambda_.1} parent=5 // pred_check_branch
        %252 = sbr.rel (%p249) target = $region12
      $region11: #{_lambda_.1} parent=5 // pred_region
        %s253 = ssub.s32 %s19, 1
        // Predicated region
        $region13: #{_lambda_.1} parent=11 // pred_check
          %p254 = pneg %p66
        $region14: #{_lambda_.1} parent=11 // pred_check_branch
          %256 = sbr.rel (%p254) target = $region16
        $region15: #{_lambda_.1} parent=11 // pred_region
          %258 = vsyncadd [#allocation3], 0
          %s259 = sshll.u32 %s1, 4
          %s260 = int_to_ptr.hbm [resolvable:$true] %s259
          %s261 = sshll.u32 [#allocation2], 4
          %s262 = int_to_ptr.vmem [resolvable:$true] %s261
          %267 = dma.hbm_to_vmem [thread:$0]  %s260, 2560, %s262, [#allocation3], 128, 128, 8
        $region16: #{_lambda_.1} parent=11 // pred_fallthru
          _
        // Predicated region
        $region17: #{_lambda_.1} parent=11 // pred_check
          %p268 = pneg %p87
        $region18: #{_lambda_.1} parent=11 // pred_check_branch
          %270 = sbr.rel (%p268) target = $region20
        $region19: #{_lambda_.1} parent=11 // pred_region
          %272 = vsyncadd [#allocation5], 0
          %s273 = sshll.u32 %s2, 4
          %s274 = int_to_ptr.hbm [resolvable:$true] %s273
          %s275 = sshll.u32 [#allocation4], 4
          %s276 = int_to_ptr.vmem [resolvable:$true] %s275
          %281 = dma.hbm_to_vmem [thread:$0]  %s274, 6144, %s276, [#allocation5], 192, 192, 12
        $region20: #{_lambda_.1} parent=11 // pred_fallthru
          _
        // Predicated region
        $region21: #{_lambda_.1} parent=11 // pred_check
          %p282 = pneg %p108
        $region22: #{_lambda_.1} parent=11 // pred_check_branch
          %284 = sbr.rel (%p282) target = $region24
        $region23: #{_lambda_.1} parent=11 // pred_region
          %286 = vsyncadd [#allocation5], 0
          %s287 = sshll.u32 %s3, 4
          %s288 = int_to_ptr.hbm [resolvable:$true] %s287
          %s289 = sshll.u32 [#allocation6], 4
          %s290 = int_to_ptr.vmem [resolvable:$true] %s289
          %295 = dma.hbm_to_vmem [thread:$0]  %s288, 6144, %s290, [#allocation5], 128, 128, 8
        $region24: #{_lambda_.1} parent=11 // pred_fallthru
          _
        // Predicated region
        $region25: #{_lambda_.1} parent=11 // pred_check
          %p296 = pneg %p129
        $region26: #{_lambda_.1} parent=11 // pred_check_branch
          %298 = sbr.rel (%p296) target = $region28
        $region27: #{_lambda_.1} parent=11 // pred_region
          _
        $region28: #{_lambda_.1} parent=11 // pred_fallthru
          _
        // Predicated region
        $region29: #{_lambda_.1} parent=11 // pred_check
          %p299 = pneg %p150
        $region30: #{_lambda_.1} parent=11 // pred_check_branch
          %301 = sbr.rel (%p299) target = $region32
        $region31: #{_lambda_.1} parent=11 // pred_region
          %303 = vsyncadd [#allocation8], 0
          %s304 = sshll.u32 %s5, 4
          %s305 = int_to_ptr.hbm [resolvable:$true] %s304
          %s306 = sshll.u32 [#allocation7], 4
          %s307 = int_to_ptr.vmem [resolvable:$true] %s306
          %312 = dma.hbm_to_vmem [thread:$0]  %s305, 1024, %s307, [#allocation8], 64, 64, 4
        $region32: #{_lambda_.1} parent=11 // pred_fallthru
          _
        // Predicated region
        $region33: #{_lambda_.1} parent=11 // pred_check
          %p313 = pneg %p171
        $region34: #{_lambda_.1} parent=11 // pred_check_branch
          %315 = sbr.rel (%p313) target = $region36
        $region35: #{_lambda_.1} parent=11 // pred_region
          %317 = vsyncadd [#allocation8], 0
          %s318 = sshll.u32 %s6, 4
          %s319 = int_to_ptr.hbm [resolvable:$true] %s318
          %s320 = sshll.u32 [#allocation9], 4
          %s321 = int_to_ptr.vmem [resolvable:$true] %s320
          %326 = dma.hbm_to_vmem [thread:$0]  %s319, 1024, %s321, [#allocation8], 64, 64, 4
        $region36: #{_lambda_.1} parent=11 // pred_fallthru
          _
        // Predicated region
        $region37: #{_lambda_.1} parent=11 // pred_check
          %p327 = pneg %p192
        $region38: #{_lambda_.1} parent=11 // pred_check_branch
          %329 = sbr.rel (%p327) target = $region40
        $region39: #{_lambda_.1} parent=11 // pred_region
          %331 = vsyncadd [#allocation11], 0
          %s332 = sshll.u32 %s7, 4
          %s333 = int_to_ptr.hbm [resolvable:$true] %s332
          %s334 = sshll.u32 [#allocation10], 4
          %s335 = int_to_ptr.vmem [resolvable:$true] %s334
          %340 = dma.hbm_to_vmem [thread:$0]  %s333, 1024, %s335, [#allocation11], 64, 64, 4
        $region40: #{_lambda_.1} parent=11 // pred_fallthru
          _
        // Predicated region
        $region41: #{_lambda_.1} parent=11 // pred_check
          %p341 = pneg %p213
        $region42: #{_lambda_.1} parent=11 // pred_check_branch
          %343 = sbr.rel (%p341) target = $region44
        $region43: #{_lambda_.1} parent=11 // pred_region
          %345 = vsyncadd [#allocation11], 0
          %s347 = sshll.u32 %s8, 4
          %s348 = int_to_ptr.hbm [resolvable:$true] %s347
          %s349 = sshll.u32 [#allocation12], 4
          %s350 = int_to_ptr.vmem [resolvable:$true] %s349
          %352 = dma.hbm_to_vmem [thread:$0]  %s348, 384, %s350, [#allocation11]
        $region44: #{_lambda_.1} parent=11 // pred_fallthru
          _
      $region12: #{_lambda_.1} parent=5 // pred_fallthru
        _
      %p353 = scmp.lt.s32.totalorder %s19, 2
      // Predicated region
      $region45: #{_lambda_.1} parent=5 // pred_check
        %p354 = pneg %p353
      $region46: #{_lambda_.1} parent=5 // pred_check_branch
        %356 = sbr.rel (%p354) target = $region48
      $region47: #{_lambda_.1} parent=5 // pred_region
        // Predicated region
        $region49: #{_lambda_.1} parent=47 // pred_check
          %p357 = pneg %p39
        $region50: #{_lambda_.1} parent=47 // pred_check_branch
          %359 = sbr.rel (%p357) target = $region52
        $region51: #{_lambda_.1} parent=47 // pred_region
          %p360 = scmp.lt.s32.totalorder %s19, 1
          %s361 = scalar_select %p360, %s19, 1
          %s362 = smul.addr %s361, 2
          %s363 = smul.addr %s362, 4
          %s364 = scalar_lea.vmem %s0, %s363
        $region52: #{_lambda_.1} parent=47 // pred_fallthru
          _
      $region48: #{_lambda_.1} parent=5 // pred_fallthru
        _
      %p365 = scmp.le.s32.totalorder 1, %s19
      %p366 = scmp.lt.s32.totalorder %s19, 3
      %p367 = pnand %p365, %p366
      %p368 = pneg %p367
      // Predicated region
      $region53: #{_lambda_.1} parent=5 // pred_check
        _
      $region54: #{_lambda_.1} parent=5 // pred_check_branch
        %370 = sbr.rel (%p367) target = $region56
      $region55: #{_lambda_.1} parent=5 // pred_region
        %s371 = ssub.s32 %s19, 1
        // Predicated region
        $region57: #{_lambda_.1} parent=55 // pred_check
          %p372 = pneg %p66
        $region58: #{_lambda_.1} parent=55 // pred_check_branch
          %374 = sbr.rel (%p372) target = $region60
        $region59: #{_lambda_.1} parent=55 // pred_region
          %376 = dma.done [#allocation3], 2560
        $region60: #{_lambda_.1} parent=55 // pred_fallthru
          _
        // Predicated region
        $region61: #{_lambda_.1} parent=55 // pred_check
          %p377 = pneg %p87
        $region62: #{_lambda_.1} parent=55 // pred_check_branch
          %379 = sbr.rel (%p377) target = $region64
        $region63: #{_lambda_.1} parent=55 // pred_region
          %381 = dma.done [#allocation5], 6144
        $region64: #{_lambda_.1} parent=55 // pred_fallthru
          _
        // Predicated region
        $region65: #{_lambda_.1} parent=55 // pred_check
          %p382 = pneg %p108
        $region66: #{_lambda_.1} parent=55 // pred_check_branch
          %384 = sbr.rel (%p382) target = $region68
        $region67: #{_lambda_.1} parent=55 // pred_region
          %386 = dma.done [#allocation5], 6144
        $region68: #{_lambda_.1} parent=55 // pred_fallthru
          _
        // Predicated region
        $region69: #{_lambda_.1} parent=55 // pred_check
          %p387 = pneg %p150
        $region70: #{_lambda_.1} parent=55 // pred_check_branch
          %389 = sbr.rel (%p387) target = $region72
        $region71: #{_lambda_.1} parent=55 // pred_region
          %391 = dma.done [#allocation8], 1024
        $region72: #{_lambda_.1} parent=55 // pred_fallthru
          _
        // Predicated region
        $region73: #{_lambda_.1} parent=55 // pred_check
          %p392 = pneg %p171
        $region74: #{_lambda_.1} parent=55 // pred_check_branch
          %394 = sbr.rel (%p392) target = $region76
        $region75: #{_lambda_.1} parent=55 // pred_region
          %396 = dma.done [#allocation8], 1024
        $region76: #{_lambda_.1} parent=55 // pred_fallthru
          _
        // Predicated region
        $region77: #{_lambda_.1} parent=55 // pred_check
          %p397 = pneg %p192
        $region78: #{_lambda_.1} parent=55 // pred_check_branch
          %399 = sbr.rel (%p397) target = $region80
        $region79: #{_lambda_.1} parent=55 // pred_region
          %401 = dma.done [#allocation11], 1024
        $region80: #{_lambda_.1} parent=55 // pred_fallthru
          _
        // Predicated region
        $region81: #{_lambda_.1} parent=55 // pred_check
          %p402 = pneg %p213
        $region82: #{_lambda_.1} parent=55 // pred_check_branch
          %404 = sbr.rel (%p402) target = $region84
        $region83: #{_lambda_.1} parent=55 // pred_region
          %406 = dma.done [#allocation11], 384
        $region84: #{_lambda_.1} parent=55 // pred_fallthru
          _
        %p407 = scmp.lt.s32.totalorder %s24, 1
        %s408 = scalar_select %p407, %s24, 1
        %s409 = smul.addr %s408, 2
        %s410 = smul.addr %s409, 4
        %s411 = scalar_lea.vmem %s0, %s410
        %p412 = pneg %p45
        %p413 = pneg %p42
        %p414 = pneg %p66
        %p415 = pneg %p63
        %p416 = pneg %p87
        %p417 = pneg %p84
        %p418 = pneg %p108
        %p419 = pneg %p105
        %p420 = pneg %p129
        %p421 = pneg %p126
        %p422 = pneg %p150
        %p423 = pneg %p147
        %p424 = pneg %p171
        %p425 = pneg %p168
        %p426 = pneg %p192
        %p427 = pneg %p189
        %p428 = pneg %p213
        %p429 = pneg %p210
        %p430 = pneg %p239
        %p431 = pneg %p236
        %p432 = scmp.lt.s32.totalorder %s24, 1
        %s433 = scalar_select %p432, %s24, 1
        %s434 = smul.addr %s433, 8
        %s435 = scalar_lea.vmem %s9, %s434
        %p436 = scmp.lt.s32.totalorder %s24, 1
        %s437 = scalar_select %p436, %s24, 1
        %s438 = smul.addr %s437, 2
        %s439 = smul.addr %s438, 4
        %s440 = scalar_lea.vmem %s0, %s439
        %p441 = scmp.lt.s32.totalorder %s24, 1
        %s442 = scalar_select %p441, %s24, 1
        %s443 = smul.addr %s442, 8
        %s444 = scalar_lea.vmem %s9, %s443
        %v446 = vld [vmem:[%s440] sm:$0xff]
        %v447 = vld [vmem:[#allocation2] sm:$0xff]
        %v448 = vld [vmem:[#allocation2 + $0x8] sm:$0xff]
        %v449 = vld [vmem:[#allocation2 + $0x10] sm:$0xff]
        %v450 = vld [vmem:[#allocation2 + $0x18] sm:$0xff]
        %v451 = vld [vmem:[#allocation2 + $0x20] sm:$0xff]
        %v452 = vld [vmem:[#allocation2 + $0x28] sm:$0xff]
        %v453 = vld [vmem:[#allocation2 + $0x30] sm:$0xff]
        %v454 = vld [vmem:[#allocation2 + $0x38] sm:$0xff]
        %v455 = vld [vmem:[#allocation2 + $0x40] sm:$0xff]
        %v456 = vld [vmem:[#allocation2 + $0x48] sm:$0xff]
        %v457 = vld [vmem:[#allocation2 + $0x50] sm:$0xff]
        %v458 = vld [vmem:[#allocation2 + $0x58] sm:$0xff]
        %v459 = vld [vmem:[#allocation2 + $0x60] sm:$0xff]
        %v460 = vld [vmem:[#allocation2 + $0x68] sm:$0xff]
        %v461 = vld [vmem:[#allocation2 + $0x70] sm:$0xff]
        %v462 = vld [vmem:[#allocation2 + $0x78] sm:$0xff]
        %v463 = vld [vmem:[#allocation2 + $0x80] sm:$0xff]
        %v464 = vld [vmem:[#allocation2 + $0x88] sm:$0xff]
        %v465 = vld [vmem:[#allocation2 + $0x90] sm:$0xff]
        %v466 = vld [vmem:[#allocation2 + $0x98] sm:$0xff]
        %v467 = vld [vmem:[#allocation12] ss:$8 sm:$0x3]
        %v469 = vperm.slane %v467, 0
        %v470 = vperm.slane %v467, 1
        %v474 = vunpack.c.l.b16 %v446
        %v475 = vunpack.c.h.b16 %v446
        %v476 = vpack.c.b16 %v474, %v474
        %v477 = vpack.c.b16 %v475, %v475
        %v499 = vunpack.c.l.b16 %v447
        %v500 = vunpack.c.h.b16 %v447
        %v501 = vunpack.c.l.b16 %v448
        %v502 = vunpack.c.h.b16 %v448
        %v503 = vunpack.c.l.b16 %v449
        %v504 = vunpack.c.h.b16 %v449
        %v505 = vunpack.c.l.b16 %v450
        %v506 = vunpack.c.h.b16 %v450
        %v507 = vunpack.c.l.b16 %v451
        %v508 = vunpack.c.h.b16 %v451
        %v509 = vunpack.c.l.b16 %v452
        %v510 = vunpack.c.h.b16 %v452
        %v511 = vunpack.c.l.b16 %v453
        %v512 = vunpack.c.h.b16 %v453
        %v513 = vunpack.c.l.b16 %v454
        %v514 = vunpack.c.h.b16 %v454
        %v515 = vunpack.c.l.b16 %v455
        %v516 = vunpack.c.h.b16 %v455
        %v517 = vunpack.c.l.b16 %v456
        %v518 = vunpack.c.h.b16 %v456
        %v519 = vunpack.c.l.b16 %v457
        %v520 = vunpack.c.h.b16 %v457
        %v521 = vunpack.c.l.b16 %v458
        %v522 = vunpack.c.h.b16 %v458
        %v523 = vunpack.c.l.b16 %v459
        %v524 = vunpack.c.h.b16 %v459
        %v525 = vunpack.c.l.b16 %v460
        %v526 = vunpack.c.h.b16 %v460
        %v527 = vunpack.c.l.b16 %v461
        %v528 = vunpack.c.h.b16 %v461
        %v529 = vunpack.c.l.b16 %v462
        %v530 = vunpack.c.h.b16 %v462
        %v531 = vunpack.c.l.b16 %v463
        %v532 = vunpack.c.h.b16 %v463
        %v533 = vunpack.c.l.b16 %v464
        %v534 = vunpack.c.h.b16 %v464
        %v535 = vunpack.c.l.b16 %v465
        %v536 = vunpack.c.h.b16 %v465
        %v537 = vunpack.c.l.b16 %v466
        %v538 = vunpack.c.h.b16 %v466
        %v539 = vpack.c.b16 %v501, %v499
        %v540 = vpack.c.b16 %v502, %v500
        %v541 = vpack.c.b16 %v505, %v503
        %v542 = vpack.c.b16 %v506, %v504
        %v543 = vpack.c.b16 %v509, %v507
        %v544 = vpack.c.b16 %v510, %v508
        %v545 = vpack.c.b16 %v513, %v511
        %v546 = vpack.c.b16 %v514, %v512
        %v547 = vpack.c.b16 %v517, %v515
        %v548 = vpack.c.b16 %v518, %v516
        %v549 = vpack.c.b16 %v521, %v519
        %v550 = vpack.c.b16 %v522, %v520
        %v551 = vpack.c.b16 %v525, %v523
        %v552 = vpack.c.b16 %v526, %v524
        %v553 = vpack.c.b16 %v529, %v527
        %v554 = vpack.c.b16 %v530, %v528
        %v555 = vpack.c.b16 %v533, %v531
        %v556 = vpack.c.b16 %v534, %v532
        %v557 = vpack.c.b16 %v537, %v535
        %v558 = vpack.c.b16 %v538, %v536
        %vm579 = vcmask 261120
        %v581 = vsel %vm579, %v477, 0
        %583 = vmatpush.bf16.msra.mxu0 %v553
        %584 = vmatpush.bf16.msra.mxu0 %v551
        %585 = vmatpush.bf16.msra.mxu0 %v549
        %586 = vmatpush.bf16.msra.mxu0 %v547
        %587 = vmatpush.bf16.msra.mxu0 %v545
        %588 = vmatpush.bf16.msra.mxu0 %v543
        %589 = vmatpush.bf16.msra.mxu0 %v541
        %590 = vmatpush.bf16.msra.mxu0 %v539
        %591 = vmatmul.bf16.gmra.mxu0 %v476
        %v592 = vpop.f32.mrf.mxu0
        %v593 = vadd.f32 %v469, %v592
        %v594 = vpop.f32.mrf.mxu0
        %595 = vdwg.mxu0
        %596 = vmatpush.bf16.msra.mxu0 0
        %597 = vmatpush.bf16.msra.mxu0 0
        %598 = vmatpush.bf16.msra.mxu0 0
        %599 = vmatpush.bf16.msra.mxu0 0
        %600 = vmatpush.bf16.msra.mxu0 0
        %601 = vmatpush.bf16.msra.mxu0 0
        %602 = vmatpush.bf16.msra.mxu0 %v557
        %603 = vmatpush.bf16.msra.mxu0 %v555
        %604 = vmatmul.bf16.gmra.mxu0 %v581
        %v605 = vpop.f32.mrf.mxu0
        %v606 = vadd.f32 %v593, %v605
        %v607 = vpop.f32.mrf.mxu0
        %608 = vdwg.mxu0
        %609 = vmatpush.bf16.msra.mxu0 %v554
        %610 = vmatpush.bf16.msra.mxu0 %v552
        %611 = vmatpush.bf16.msra.mxu0 %v550
        %612 = vmatpush.bf16.msra.mxu0 %v548
        %613 = vmatpush.bf16.msra.mxu0 %v546
        %614 = vmatpush.bf16.msra.mxu0 %v544
        %615 = vmatpush.bf16.msra.mxu0 %v542
        %616 = vmatpush.bf16.msra.mxu0 %v540
        %617 = vmatmul.bf16.gmra.mxu0 %v476
        %v618 = vpop.f32.mrf.mxu0
        %v619 = vadd.f32 %v470, %v618
        %v620 = vpop.f32.mrf.mxu0
        %621 = vdwg.mxu0
        %622 = vmatpush.bf16.msra.mxu0 0
        %623 = vmatpush.bf16.msra.mxu0 0
        %624 = vmatpush.bf16.msra.mxu0 0
        %625 = vmatpush.bf16.msra.mxu0 0
        %626 = vmatpush.bf16.msra.mxu0 0
        %627 = vmatpush.bf16.msra.mxu0 0
        %628 = vmatpush.bf16.msra.mxu0 %v558
        %629 = vmatpush.bf16.msra.mxu0 %v556
        %630 = vmatmul.bf16.gmra.mxu0 %v581
        %v631 = vpop.f32.mrf.mxu0
        %v632 = vadd.f32 %v619, %v631
        %v633 = vpop.f32.mrf.mxu0
        %634 = vdwg.mxu0
        %v635 = vtanh.pop %v606
        %v636 = vtanh.pop %v632
        %v637 = vpack.c.bf16 %v635, %v635
        %v638 = vpack.c.bf16 %v636, %v636
        %v639 = vld [vmem:[#allocation4] sm:$0xff]
        %v640 = vld [vmem:[#allocation4 + $0x8] sm:$0xf]
        %v641 = vld [vmem:[#allocation4 + $0xc] sm:$0xff]
        %v642 = vld [vmem:[#allocation4 + $0x14] sm:$0xf]
        %v643 = vld [vmem:[#allocation4 + $0x18] sm:$0xff]
        %v644 = vld [vmem:[#allocation4 + $0x20] sm:$0xf]
        %v645 = vld [vmem:[#allocation4 + $0x24] sm:$0xff]
        %v646 = vld [vmem:[#allocation4 + $0x2c] sm:$0xf]
        %v647 = vld [vmem:[#allocation4 + $0x30] sm:$0xff]
        %v648 = vld [vmem:[#allocation4 + $0x38] sm:$0xf]
        %v649 = vld [vmem:[#allocation4 + $0x3c] sm:$0xff]
        %v650 = vld [vmem:[#allocation4 + $0x44] sm:$0xf]
        %v651 = vld [vmem:[#allocation4 + $0x48] sm:$0xff]
        %v652 = vld [vmem:[#allocation4 + $0x50] sm:$0xf]
        %v653 = vld [vmem:[#allocation4 + $0x54] sm:$0xff]
        %v654 = vld [vmem:[#allocation4 + $0x5c] sm:$0xf]
        %v655 = vld [vmem:[#allocation4 + $0x60] sm:$0xff]
        %v656 = vld [vmem:[#allocation4 + $0x68] sm:$0xf]
        %v657 = vld [vmem:[#allocation4 + $0x6c] sm:$0xff]
        %v658 = vld [vmem:[#allocation4 + $0x74] sm:$0xf]
        %v659 = vld [vmem:[#allocation4 + $0x78] sm:$0xff]
        %v660 = vld [vmem:[#allocation4 + $0x80] sm:$0xf]
        %v661 = vld [vmem:[#allocation4 + $0x84] sm:$0xff]
        %v662 = vld [vmem:[#allocation4 + $0x8c] sm:$0xf]
        %v663 = vld [vmem:[#allocation4 + $0x90] sm:$0xff]
        %v664 = vld [vmem:[#allocation4 + $0x98] sm:$0xf]
        %v665 = vld [vmem:[#allocation4 + $0x9c] sm:$0xff]
        %v666 = vld [vmem:[#allocation4 + $0xa4] sm:$0xf]
        %v667 = vld [vmem:[#allocation4 + $0xa8] sm:$0xff]
        %v668 = vld [vmem:[#allocation4 + $0xb0] sm:$0xf]
        %v669 = vld [vmem:[#allocation4 + $0xb4] sm:$0xff]
        %v670 = vld [vmem:[#allocation4 + $0xbc] sm:$0xf]
        %v671 = vld [vmem:[#allocation4 + $0xc0] sm:$0xff]
        %v672 = vld [vmem:[#allocation4 + $0xc8] sm:$0xf]
        %v673 = vld [vmem:[#allocation4 + $0xcc] sm:$0xff]
        %v674 = vld [vmem:[#allocation4 + $0xd4] sm:$0xf]
        %v675 = vld [vmem:[#allocation4 + $0xd8] sm:$0xff]
        %v676 = vld [vmem:[#allocation4 + $0xe0] sm:$0xf]
        %v677 = vld [vmem:[#allocation4 + $0xe4] sm:$0xff]
        %v678 = vld [vmem:[#allocation4 + $0xec] sm:$0xf]
        %v679 = vld [vmem:[#allocation4 + $0xf0] sm:$0xff]
        %v680 = vld [vmem:[#allocation4 + $0xf8] sm:$0xf]
        %v681 = vld [vmem:[#allocation4 + $0xfc] sm:$0xff]
        %v682 = vld [vmem:[#allocation4 + $0x104] sm:$0xf]
        %v683 = vld [vmem:[#allocation4 + $0x108] sm:$0xff]
        %v684 = vld [vmem:[#allocation4 + $0x110] sm:$0xf]
        %v685 = vld [vmem:[#allocation4 + $0x114] sm:$0xff]
        %v686 = vld [vmem:[#allocation4 + $0x11c] sm:$0xf]
        %v687 = vld [vmem:[#allocation4 + $0x120] sm:$0xff]
        %v688 = vld [vmem:[#allocation4 + $0x128] sm:$0xf]
        %v689 = vld [vmem:[#allocation4 + $0x12c] sm:$0xff]
        %v690 = vld [vmem:[#allocation4 + $0x134] sm:$0xf]
        %v691 = vld [vmem:[#allocation4 + $0x138] sm:$0xff]
        %v692 = vld [vmem:[#allocation4 + $0x140] sm:$0xf]
        %v693 = vld [vmem:[#allocation4 + $0x144] sm:$0xff]
        %v694 = vld [vmem:[#allocation4 + $0x14c] sm:$0xf]
        %v695 = vld [vmem:[#allocation4 + $0x150] sm:$0xff]
        %v696 = vld [vmem:[#allocation4 + $0x158] sm:$0xf]
        %v697 = vld [vmem:[#allocation4 + $0x15c] sm:$0xff]
        %v698 = vld [vmem:[#allocation4 + $0x164] sm:$0xf]
        %v699 = vld [vmem:[#allocation4 + $0x168] sm:$0xff]
        %v700 = vld [vmem:[#allocation4 + $0x170] sm:$0xf]
        %v701 = vld [vmem:[#allocation4 + $0x174] sm:$0xff]
        %v702 = vld [vmem:[#allocation4 + $0x17c] sm:$0xf]
        %s703 = scalar_lea.vmem [#allocation12], 1
        %v704 = vld [vmem:[%s703] ss:$8 sm:$0x7]
        %v706 = vperm.slane %v704, 0
        %v707 = vperm.slane %v704, 1
        %v708 = vperm.slane %v704, 2
        %v776 = vunpack.c.l.b16 %v639
        %v777 = vunpack.c.h.b16 %v639
        %v778 = vunpack.c.l.b16 %v640
        %v779 = vunpack.c.l.b16 %v641
        %v780 = vunpack.c.h.b16 %v641
        %v781 = vunpack.c.l.b16 %v642
        %v782 = vunpack.c.l.b16 %v643
        %v783 = vunpack.c.h.b16 %v643
        %v784 = vunpack.c.l.b16 %v644
        %v785 = vunpack.c.l.b16 %v645
        %v786 = vunpack.c.h.b16 %v645
        %v787 = vunpack.c.l.b16 %v646
        %v788 = vunpack.c.l.b16 %v647
        %v789 = vunpack.c.h.b16 %v647
        %v790 = vunpack.c.l.b16 %v648
        %v791 = vunpack.c.l.b16 %v649
        %v792 = vunpack.c.h.b16 %v649
        %v793 = vunpack.c.l.b16 %v650
        %v794 = vunpack.c.l.b16 %v651
        %v795 = vunpack.c.h.b16 %v651
        %v796 = vunpack.c.l.b16 %v652
        %v797 = vunpack.c.l.b16 %v653
        %v798 = vunpack.c.h.b16 %v653
        %v799 = vunpack.c.l.b16 %v654
        %v800 = vunpack.c.l.b16 %v655
        %v801 = vunpack.c.h.b16 %v655
        %v802 = vunpack.c.l.b16 %v656
        %v803 = vunpack.c.l.b16 %v657
        %v804 = vunpack.c.h.b16 %v657
        %v805 = vunpack.c.l.b16 %v658
        %v806 = vunpack.c.l.b16 %v659
        %v807 = vunpack.c.h.b16 %v659
        %v808 = vunpack.c.l.b16 %v660
        %v809 = vunpack.c.l.b16 %v661
        %v810 = vunpack.c.h.b16 %v661
        %v811 = vunpack.c.l.b16 %v662
        %v812 = vunpack.c.l.b16 %v663
        %v813 = vunpack.c.h.b16 %v663
        %v814 = vunpack.c.l.b16 %v664
        %v815 = vunpack.c.l.b16 %v665
        %v816 = vunpack.c.h.b16 %v665
        %v817 = vunpack.c.l.b16 %v666
        %v818 = vunpack.c.l.b16 %v667
        %v819 = vunpack.c.h.b16 %v667
        %v820 = vunpack.c.l.b16 %v668
        %v821 = vunpack.c.l.b16 %v669
        %v822 = vunpack.c.h.b16 %v669
        %v823 = vunpack.c.l.b16 %v670
        %v824 = vunpack.c.l.b16 %v671
        %v825 = vunpack.c.h.b16 %v671
        %v826 = vunpack.c.l.b16 %v672
        %v827 = vunpack.c.l.b16 %v673
        %v828 = vunpack.c.h.b16 %v673
        %v829 = vunpack.c.l.b16 %v674
        %v830 = vunpack.c.l.b16 %v675
        %v831 = vunpack.c.h.b16 %v675
        %v832 = vunpack.c.l.b16 %v676
        %v833 = vunpack.c.l.b16 %v677
        %v834 = vunpack.c.h.b16 %v677
        %v835 = vunpack.c.l.b16 %v678
        %v836 = vunpack.c.l.b16 %v679
        %v837 = vunpack.c.h.b16 %v679
        %v838 = vunpack.c.l.b16 %v680
        %v839 = vunpack.c.l.b16 %v681
        %v840 = vunpack.c.h.b16 %v681
        %v841 = vunpack.c.l.b16 %v682
        %v842 = vunpack.c.l.b16 %v683
        %v843 = vunpack.c.h.b16 %v683
        %v844 = vunpack.c.l.b16 %v684
        %v845 = vunpack.c.l.b16 %v685
        %v846 = vunpack.c.h.b16 %v685
        %v847 = vunpack.c.l.b16 %v686
        %v848 = vunpack.c.l.b16 %v687
        %v849 = vunpack.c.h.b16 %v687
        %v850 = vunpack.c.l.b16 %v688
        %v851 = vunpack.c.l.b16 %v689
        %v852 = vunpack.c.h.b16 %v689
        %v853 = vunpack.c.l.b16 %v690
        %v854 = vunpack.c.l.b16 %v691
        %v855 = vunpack.c.h.b16 %v691
        %v856 = vunpack.c.l.b16 %v692
        %v857 = vunpack.c.l.b16 %v693
        %v858 = vunpack.c.h.b16 %v693
        %v859 = vunpack.c.l.b16 %v694
        %v860 = vunpack.c.l.b16 %v695
        %v861 = vunpack.c.h.b16 %v695
        %v862 = vunpack.c.l.b16 %v696
        %v863 = vunpack.c.l.b16 %v697
        %v864 = vunpack.c.h.b16 %v697
        %v865 = vunpack.c.l.b16 %v698
        %v866 = vunpack.c.l.b16 %v699
        %v867 = vunpack.c.h.b16 %v699
        %v868 = vunpack.c.l.b16 %v700
        %v869 = vunpack.c.l.b16 %v701
        %v870 = vunpack.c.h.b16 %v701
        %v871 = vunpack.c.l.b16 %v702
        %v872 = vpack.c.b16 %v779, %v776
        %v873 = vpack.c.b16 %v780, %v777
        %v874 = vpack.c.b16 %v781, %v778
        %v875 = vpack.c.b16 %v785, %v782
        %v876 = vpack.c.b16 %v786, %v783
        %v877 = vpack.c.b16 %v787, %v784
        %v878 = vpack.c.b16 %v791, %v788
        %v879 = vpack.c.b16 %v792, %v789
        %v880 = vpack.c.b16 %v793, %v790
        %v881 = vpack.c.b16 %v797, %v794
        %v882 = vpack.c.b16 %v798, %v795
        %v883 = vpack.c.b16 %v799, %v796
        %v884 = vpack.c.b16 %v803, %v800
        %v885 = vpack.c.b16 %v804, %v801
        %v886 = vpack.c.b16 %v805, %v802
        %v887 = vpack.c.b16 %v809, %v806
        %v888 = vpack.c.b16 %v810, %v807
        %v889 = vpack.c.b16 %v811, %v808
        %v890 = vpack.c.b16 %v815, %v812
        %v891 = vpack.c.b16 %v816, %v813
        %v892 = vpack.c.b16 %v817, %v814
        %v893 = vpack.c.b16 %v821, %v818
        %v894 = vpack.c.b16 %v822, %v819
        %v895 = vpack.c.b16 %v823, %v820
        %v896 = vpack.c.b16 %v827, %v824
        %v897 = vpack.c.b16 %v828, %v825
        %v898 = vpack.c.b16 %v829, %v826
        %v899 = vpack.c.b16 %v833, %v830
        %v900 = vpack.c.b16 %v834, %v831
        %v901 = vpack.c.b16 %v835, %v832
        %v902 = vpack.c.b16 %v839, %v836
        %v903 = vpack.c.b16 %v840, %v837
        %v904 = vpack.c.b16 %v841, %v838
        %v905 = vpack.c.b16 %v845, %v842
        %v906 = vpack.c.b16 %v846, %v843
        %v907 = vpack.c.b16 %v847, %v844
        %v908 = vpack.c.b16 %v851, %v848
        %v909 = vpack.c.b16 %v852, %v849
        %v910 = vpack.c.b16 %v853, %v850
        %v911 = vpack.c.b16 %v857, %v854
        %v912 = vpack.c.b16 %v858, %v855
        %v913 = vpack.c.b16 %v859, %v856
        %v914 = vpack.c.b16 %v863, %v860
        %v915 = vpack.c.b16 %v864, %v861
        %v916 = vpack.c.b16 %v865, %v862
        %v917 = vpack.c.b16 %v869, %v866
        %v918 = vpack.c.b16 %v870, %v867
        %v919 = vpack.c.b16 %v871, %v868
        %968 = vmatpush.bf16.msra.mxu0 %v893
        %969 = vmatpush.bf16.msra.mxu0 %v890
        %970 = vmatpush.bf16.msra.mxu0 %v887
        %971 = vmatpush.bf16.msra.mxu0 %v884
        %972 = vmatpush.bf16.msra.mxu0 %v881
        %973 = vmatpush.bf16.msra.mxu0 %v878
        %974 = vmatpush.bf16.msra.mxu0 %v875
        %975 = vmatpush.bf16.msra.mxu0 %v872
        %976 = vmatmul.bf16.gmra.mxu0 %v637
        %v977 = vpop.f32.mrf.mxu0
        %v978 = vadd.f32 %v706, %v977
        %v979 = vpop.f32.mrf.mxu0
        %980 = vdwg.mxu0
        %981 = vmatpush.bf16.msra.mxu0 %v917
        %982 = vmatpush.bf16.msra.mxu0 %v914
        %983 = vmatpush.bf16.msra.mxu0 %v911
        %984 = vmatpush.bf16.msra.mxu0 %v908
        %985 = vmatpush.bf16.msra.mxu0 %v905
        %986 = vmatpush.bf16.msra.mxu0 %v902
        %987 = vmatpush.bf16.msra.mxu0 %v899
        %988 = vmatpush.bf16.msra.mxu0 %v896
        %989 = vmatmul.bf16.gmra.mxu0 %v638
        %v990 = vpop.f32.mrf.mxu0
        %v991 = vadd.f32 %v978, %v990
        %v992 = vpop.f32.mrf.mxu0
        %993 = vdwg.mxu0
        %994 = vmatpush.bf16.msra.mxu0 %v894
        %995 = vmatpush.bf16.msra.mxu0 %v891
        %996 = vmatpush.bf16.msra.mxu0 %v888
        %997 = vmatpush.bf16.msra.mxu0 %v885
        %998 = vmatpush.bf16.msra.mxu0 %v882
        %999 = vmatpush.bf16.msra.mxu0 %v879
        %1000 = vmatpush.bf16.msra.mxu0 %v876
        %1001 = vmatpush.bf16.msra.mxu0 %v873
        %1002 = vmatmul.bf16.gmra.mxu0 %v637
        %v1003 = vpop.f32.mrf.mxu0
        %v1004 = vadd.f32 %v707, %v1003
        %v1005 = vpop.f32.mrf.mxu0
        %1006 = vdwg.mxu0
        %1007 = vmatpush.bf16.msra.mxu0 %v918
        %1008 = vmatpush.bf16.msra.mxu0 %v915
        %1009 = vmatpush.bf16.msra.mxu0 %v912
        %1010 = vmatpush.bf16.msra.mxu0 %v909
        %1011 = vmatpush.bf16.msra.mxu0 %v906
        %1012 = vmatpush.bf16.msra.mxu0 %v903
        %1013 = vmatpush.bf16.msra.mxu0 %v900
        %1014 = vmatpush.bf16.msra.mxu0 %v897
        %1015 = vmatmul.bf16.gmra.mxu0 %v638
        %v1016 = vpop.f32.mrf.mxu0
        %v1017 = vadd.f32 %v1004, %v1016
        %v1018 = vpop.f32.mrf.mxu0
        %1019 = vdwg.mxu0
        %1020 = vmatpush.bf16.msra.mxu0 %v895
        %1021 = vmatpush.bf16.msra.mxu0 %v892
        %1022 = vmatpush.bf16.msra.mxu0 %v889
        %1023 = vmatpush.bf16.msra.mxu0 %v886
        %1024 = vmatpush.bf16.msra.mxu0 %v883
        %1025 = vmatpush.bf16.msra.mxu0 %v880
        %1026 = vmatpush.bf16.msra.mxu0 %v877
        %1027 = vmatpush.bf16.msra.mxu0 %v874
        %1028 = vmatmul.bf16.gmra.mxu0 %v637
        %v1029 = vpop.f32.mrf.mxu0
        %v1030 = vadd.f32 %v708, %v1029
        %v1031 = vpop.f32.mrf.mxu0
        %1032 = vdwg.mxu0
        %1033 = vmatpush.bf16.msra.mxu0 %v919
        %1034 = vmatpush.bf16.msra.mxu0 %v916
        %1035 = vmatpush.bf16.msra.mxu0 %v913
        %1036 = vmatpush.bf16.msra.mxu0 %v910
        %1037 = vmatpush.bf16.msra.mxu0 %v907
        %1038 = vmatpush.bf16.msra.mxu0 %v904
        %1039 = vmatpush.bf16.msra.mxu0 %v901
        %1040 = vmatpush.bf16.msra.mxu0 %v898
        %1041 = vmatmul.bf16.gmra.mxu0 %v638
        %v1042 = vpop.f32.mrf.mxu0
        %v1043 = vadd.f32 %v1030, %v1042
        %v1044 = vpop.f32.mrf.mxu0
        %1045 = vdwg.mxu0
        %v1046 = vtanh.pop %v991
        %v1047 = vtanh.pop %v1017
        %v1048 = vtanh.pop %v1043
        %v1049 = vpack.c.bf16 %v1046, %v1046
        %v1050 = vpack.c.bf16 %v1047, %v1047
        %v1051 = vpack.c.bf16 %v1048, %v1048
        %v1052 = vld [vmem:[#allocation6] sm:$0xff]
        %v1053 = vld [vmem:[#allocation6 + $0x8] sm:$0xff]
        %v1054 = vld [vmem:[#allocation6 + $0x10] sm:$0xff]
        %v1055 = vld [vmem:[#allocation6 + $0x18] sm:$0xff]
        %v1056 = vld [vmem:[#allocation6 + $0x20] sm:$0xff]
        %v1057 = vld [vmem:[#allocation6 + $0x28] sm:$0xff]
        %v1058 = vld [vmem:[#allocation6 + $0x30] sm:$0xff]
        %v1059 = vld [vmem:[#allocation6 + $0x38] sm:$0xff]
        %v1060 = vld [vmem:[#allocation6 + $0x40] sm:$0xff]
        %v1061 = vld [vmem:[#allocation6 + $0x48] sm:$0xff]
        %v1062 = vld [vmem:[#allocation6 + $0x50] sm:$0xff]
        %v1063 = vld [vmem:[#allocation6 + $0x58] sm:$0xff]
        %v1064 = vld [vmem:[#allocation6 + $0x60] sm:$0xff]
        %v1065 = vld [vmem:[#allocation6 + $0x68] sm:$0xff]
        %v1066 = vld [vmem:[#allocation6 + $0x70] sm:$0xff]
        %v1067 = vld [vmem:[#allocation6 + $0x78] sm:$0xff]
        %v1068 = vld [vmem:[#allocation6 + $0x80] sm:$0xff]
        %v1069 = vld [vmem:[#allocation6 + $0x88] sm:$0xff]
        %v1070 = vld [vmem:[#allocation6 + $0x90] sm:$0xff]
        %v1071 = vld [vmem:[#allocation6 + $0x98] sm:$0xff]
        %v1072 = vld [vmem:[#allocation6 + $0xa0] sm:$0xff]
        %v1073 = vld [vmem:[#allocation6 + $0xa8] sm:$0xff]
        %v1074 = vld [vmem:[#allocation6 + $0xb0] sm:$0xff]
        %v1075 = vld [vmem:[#allocation6 + $0xb8] sm:$0xff]
        %v1076 = vld [vmem:[#allocation6 + $0xc0] sm:$0xff]
        %v1077 = vld [vmem:[#allocation6 + $0xc8] sm:$0xff]
        %v1078 = vld [vmem:[#allocation6 + $0xd0] sm:$0xff]
        %v1079 = vld [vmem:[#allocation6 + $0xd8] sm:$0xff]
        %v1080 = vld [vmem:[#allocation6 + $0xe0] sm:$0xff]
        %v1081 = vld [vmem:[#allocation6 + $0xe8] sm:$0xff]
        %v1082 = vld [vmem:[#allocation6 + $0xf0] sm:$0xff]
        %v1083 = vld [vmem:[#allocation6 + $0xf8] sm:$0xff]
        %v1084 = vld [vmem:[#allocation6 + $0x100] sm:$0xff]
        %v1085 = vld [vmem:[#allocation6 + $0x108] sm:$0xff]
        %v1086 = vld [vmem:[#allocation6 + $0x110] sm:$0xff]
        %v1087 = vld [vmem:[#allocation6 + $0x118] sm:$0xff]
        %v1088 = vld [vmem:[#allocation6 + $0x120] sm:$0xff]
        %v1089 = vld [vmem:[#allocation6 + $0x128] sm:$0xff]
        %v1090 = vld [vmem:[#allocation6 + $0x130] sm:$0xff]
        %v1091 = vld [vmem:[#allocation6 + $0x138] sm:$0xff]
        %v1092 = vld [vmem:[#allocation6 + $0x140] sm:$0xff]
        %v1093 = vld [vmem:[#allocation6 + $0x148] sm:$0xff]
        %v1094 = vld [vmem:[#allocation6 + $0x150] sm:$0xff]
        %v1095 = vld [vmem:[#allocation6 + $0x158] sm:$0xff]
        %v1096 = vld [vmem:[#allocation6 + $0x160] sm:$0xff]
        %v1097 = vld [vmem:[#allocation6 + $0x168] sm:$0xff]
        %v1098 = vld [vmem:[#allocation6 + $0x170] sm:$0xff]
        %v1099 = vld [vmem:[#allocation6 + $0x178] sm:$0xff]
        %s1100 = scalar_lea.vmem [#allocation12], 2
        %v1101 = vld [vmem:[%s1100] ss:$8 sm:$0x3]
        %v1103 = vperm.slane %v1101, 0
        %v1104 = vperm.slane %v1101, 1
        %v1155 = vunpack.c.l.b16 %v1052
        %v1156 = vunpack.c.h.b16 %v1052
        %v1157 = vunpack.c.l.b16 %v1053
        %v1158 = vunpack.c.h.b16 %v1053
        %v1159 = vunpack.c.l.b16 %v1054
        %v1160 = vunpack.c.h.b16 %v1054
        %v1161 = vunpack.c.l.b16 %v1055
        %v1162 = vunpack.c.h.b16 %v1055
        %v1163 = vunpack.c.l.b16 %v1056
        %v1164 = vunpack.c.h.b16 %v1056
        %v1165 = vunpack.c.l.b16 %v1057
        %v1166 = vunpack.c.h.b16 %v1057
        %v1167 = vunpack.c.l.b16 %v1058
        %v1168 = vunpack.c.h.b16 %v1058
        %v1169 = vunpack.c.l.b16 %v1059
        %v1170 = vunpack.c.h.b16 %v1059
        %v1171 = vunpack.c.l.b16 %v1060
        %v1172 = vunpack.c.h.b16 %v1060
        %v1173 = vunpack.c.l.b16 %v1061
        %v1174 = vunpack.c.h.b16 %v1061
        %v1175 = vunpack.c.l.b16 %v1062
        %v1176 = vunpack.c.h.b16 %v1062
        %v1177 = vunpack.c.l.b16 %v1063
        %v1178 = vunpack.c.h.b16 %v1063
        %v1179 = vunpack.c.l.b16 %v1064
        %v1180 = vunpack.c.h.b16 %v1064
        %v1181 = vunpack.c.l.b16 %v1065
        %v1182 = vunpack.c.h.b16 %v1065
        %v1183 = vunpack.c.l.b16 %v1066
        %v1184 = vunpack.c.h.b16 %v1066
        %v1185 = vunpack.c.l.b16 %v1067
        %v1186 = vunpack.c.h.b16 %v1067
        %v1187 = vunpack.c.l.b16 %v1068
        %v1188 = vunpack.c.h.b16 %v1068
        %v1189 = vunpack.c.l.b16 %v1069
        %v1190 = vunpack.c.h.b16 %v1069
        %v1191 = vunpack.c.l.b16 %v1070
        %v1192 = vunpack.c.h.b16 %v1070
        %v1193 = vunpack.c.l.b16 %v1071
        %v1194 = vunpack.c.h.b16 %v1071
        %v1195 = vunpack.c.l.b16 %v1072
        %v1196 = vunpack.c.h.b16 %v1072
        %v1197 = vunpack.c.l.b16 %v1073
        %v1198 = vunpack.c.h.b16 %v1073
        %v1199 = vunpack.c.l.b16 %v1074
        %v1200 = vunpack.c.h.b16 %v1074
        %v1201 = vunpack.c.l.b16 %v1075
        %v1202 = vunpack.c.h.b16 %v1075
        %v1203 = vunpack.c.l.b16 %v1076
        %v1204 = vunpack.c.h.b16 %v1076
        %v1205 = vunpack.c.l.b16 %v1077
        %v1206 = vunpack.c.h.b16 %v1077
        %v1207 = vunpack.c.l.b16 %v1078
        %v1208 = vunpack.c.h.b16 %v1078
        %v1209 = vunpack.c.l.b16 %v1079
        %v1210 = vunpack.c.h.b16 %v1079
        %v1211 = vunpack.c.l.b16 %v1080
        %v1212 = vunpack.c.h.b16 %v1080
        %v1213 = vunpack.c.l.b16 %v1081
        %v1214 = vunpack.c.h.b16 %v1081
        %v1215 = vunpack.c.l.b16 %v1082
        %v1216 = vunpack.c.h.b16 %v1082
        %v1217 = vunpack.c.l.b16 %v1083
        %v1218 = vunpack.c.h.b16 %v1083
        %v1219 = vunpack.c.l.b16 %v1084
        %v1220 = vunpack.c.h.b16 %v1084
        %v1221 = vunpack.c.l.b16 %v1085
        %v1222 = vunpack.c.h.b16 %v1085
        %v1223 = vunpack.c.l.b16 %v1086
        %v1224 = vunpack.c.h.b16 %v1086
        %v1225 = vunpack.c.l.b16 %v1087
        %v1226 = vunpack.c.h.b16 %v1087
        %v1227 = vunpack.c.l.b16 %v1088
        %v1228 = vunpack.c.h.b16 %v1088
        %v1229 = vunpack.c.l.b16 %v1089
        %v1230 = vunpack.c.h.b16 %v1089
        %v1231 = vunpack.c.l.b16 %v1090
        %v1232 = vunpack.c.h.b16 %v1090
        %v1233 = vunpack.c.l.b16 %v1091
        %v1234 = vunpack.c.h.b16 %v1091
        %v1235 = vunpack.c.l.b16 %v1092
        %v1236 = vunpack.c.h.b16 %v1092
        %v1237 = vunpack.c.l.b16 %v1093
        %v1238 = vunpack.c.h.b16 %v1093
        %v1239 = vunpack.c.l.b16 %v1094
        %v1240 = vunpack.c.h.b16 %v1094
        %v1241 = vunpack.c.l.b16 %v1095
        %v1242 = vunpack.c.h.b16 %v1095
        %v1243 = vunpack.c.l.b16 %v1096
        %v1244 = vunpack.c.h.b16 %v1096
        %v1245 = vunpack.c.l.b16 %v1097
        %v1246 = vunpack.c.h.b16 %v1097
        %v1247 = vunpack.c.l.b16 %v1098
        %v1248 = vunpack.c.h.b16 %v1098
        %v1249 = vunpack.c.l.b16 %v1099
        %v1250 = vunpack.c.h.b16 %v1099
        %v1251 = vpack.c.b16 %v1157, %v1155
        %v1252 = vpack.c.b16 %v1158, %v1156
        %v1253 = vpack.c.b16 %v1161, %v1159
        %v1254 = vpack.c.b16 %v1162, %v1160
        %v1255 = vpack.c.b16 %v1165, %v1163
        %v1256 = vpack.c.b16 %v1166, %v1164
        %v1257 = vpack.c.b16 %v1169, %v1167
        %v1258 = vpack.c.b16 %v1170, %v1168
        %v1259 = vpack.c.b16 %v1173, %v1171
        %v1260 = vpack.c.b16 %v1174, %v1172
        %v1261 = vpack.c.b16 %v1177, %v1175
        %v1262 = vpack.c.b16 %v1178, %v1176
        %v1263 = vpack.c.b16 %v1181, %v1179
        %v1264 = vpack.c.b16 %v1182, %v1180
        %v1265 = vpack.c.b16 %v1185, %v1183
        %v1266 = vpack.c.b16 %v1186, %v1184
        %v1267 = vpack.c.b16 %v1189, %v1187
        %v1268 = vpack.c.b16 %v1190, %v1188
        %v1269 = vpack.c.b16 %v1193, %v1191
        %v1270 = vpack.c.b16 %v1194, %v1192
        %v1271 = vpack.c.b16 %v1197, %v1195
        %v1272 = vpack.c.b16 %v1198, %v1196
        %v1273 = vpack.c.b16 %v1201, %v1199
        %v1274 = vpack.c.b16 %v1202, %v1200
        %v1275 = vpack.c.b16 %v1205, %v1203
        %v1276 = vpack.c.b16 %v1206, %v1204
        %v1277 = vpack.c.b16 %v1209, %v1207
        %v1278 = vpack.c.b16 %v1210, %v1208
        %v1279 = vpack.c.b16 %v1213, %v1211
        %v1280 = vpack.c.b16 %v1214, %v1212
        %v1281 = vpack.c.b16 %v1217, %v1215
        %v1282 = vpack.c.b16 %v1218, %v1216
        %v1283 = vpack.c.b16 %v1221, %v1219
        %v1284 = vpack.c.b16 %v1222, %v1220
        %v1285 = vpack.c.b16 %v1225, %v1223
        %v1286 = vpack.c.b16 %v1226, %v1224
        %v1287 = vpack.c.b16 %v1229, %v1227
        %v1288 = vpack.c.b16 %v1230, %v1228
        %v1289 = vpack.c.b16 %v1233, %v1231
        %v1290 = vpack.c.b16 %v1234, %v1232
        %v1291 = vpack.c.b16 %v1237, %v1235
        %v1292 = vpack.c.b16 %v1238, %v1236
        %v1293 = vpack.c.b16 %v1241, %v1239
        %v1294 = vpack.c.b16 %v1242, %v1240
        %v1295 = vpack.c.b16 %v1245, %v1243
        %v1296 = vpack.c.b16 %v1246, %v1244
        %v1297 = vpack.c.b16 %v1249, %v1247
        %v1298 = vpack.c.b16 %v1250, %v1248
        %1347 = vmatpush.bf16.msra.mxu0 %v1265
        %1348 = vmatpush.bf16.msra.mxu0 %v1263
        %1349 = vmatpush.bf16.msra.mxu0 %v1261
        %1350 = vmatpush.bf16.msra.mxu0 %v1259
        %1351 = vmatpush.bf16.msra.mxu0 %v1257
        %1352 = vmatpush.bf16.msra.mxu0 %v1255
        %1353 = vmatpush.bf16.msra.mxu0 %v1253
        %1354 = vmatpush.bf16.msra.mxu0 %v1251
        %1355 = vmatmul.bf16.gmra.mxu0 %v1049
        %v1356 = vpop.f32.mrf.mxu0
        %v1357 = vadd.f32 %v1103, %v1356
        %v1358 = vpop.f32.mrf.mxu0
        %1359 = vdwg.mxu0
        %1360 = vmatpush.bf16.msra.mxu0 %v1281
        %1361 = vmatpush.bf16.msra.mxu0 %v1279
        %1362 = vmatpush.bf16.msra.mxu0 %v1277
        %1363 = vmatpush.bf16.msra.mxu0 %v1275
        %1364 = vmatpush.bf16.msra.mxu0 %v1273
        %1365 = vmatpush.bf16.msra.mxu0 %v1271
        %1366 = vmatpush.bf16.msra.mxu0 %v1269
        %1367 = vmatpush.bf16.msra.mxu0 %v1267
        %1368 = vmatmul.bf16.gmra.mxu0 %v1050
        %v1369 = vpop.f32.mrf.mxu0
        %v1370 = vadd.f32 %v1357, %v1369
        %v1371 = vpop.f32.mrf.mxu0
        %1372 = vdwg.mxu0
        %1373 = vmatpush.bf16.msra.mxu0 %v1297
        %1374 = vmatpush.bf16.msra.mxu0 %v1295
        %1375 = vmatpush.bf16.msra.mxu0 %v1293
        %1376 = vmatpush.bf16.msra.mxu0 %v1291
        %1377 = vmatpush.bf16.msra.mxu0 %v1289
        %1378 = vmatpush.bf16.msra.mxu0 %v1287
        %1379 = vmatpush.bf16.msra.mxu0 %v1285
        %1380 = vmatpush.bf16.msra.mxu0 %v1283
        %1381 = vmatmul.bf16.gmra.mxu0 %v1051
        %v1382 = vpop.f32.mrf.mxu0
        %v1383 = vadd.f32 %v1370, %v1382
        %v1384 = vpop.f32.mrf.mxu0
        %1385 = vdwg.mxu0
        %1386 = vmatpush.bf16.msra.mxu0 %v1266
        %1387 = vmatpush.bf16.msra.mxu0 %v1264
        %1388 = vmatpush.bf16.msra.mxu0 %v1262
        %1389 = vmatpush.bf16.msra.mxu0 %v1260
        %1390 = vmatpush.bf16.msra.mxu0 %v1258
        %1391 = vmatpush.bf16.msra.mxu0 %v1256
        %1392 = vmatpush.bf16.msra.mxu0 %v1254
        %1393 = vmatpush.bf16.msra.mxu0 %v1252
        %1394 = vmatmul.bf16.gmra.mxu0 %v1049
        %v1395 = vpop.f32.mrf.mxu0
        %v1396 = vadd.f32 %v1104, %v1395
        %v1397 = vpop.f32.mrf.mxu0
        %1398 = vdwg.mxu0
        %1399 = vmatpush.bf16.msra.mxu0 %v1282
        %1400 = vmatpush.bf16.msra.mxu0 %v1280
        %1401 = vmatpush.bf16.msra.mxu0 %v1278
        %1402 = vmatpush.bf16.msra.mxu0 %v1276
        %1403 = vmatpush.bf16.msra.mxu0 %v1274
        %1404 = vmatpush.bf16.msra.mxu0 %v1272
        %1405 = vmatpush.bf16.msra.mxu0 %v1270
        %1406 = vmatpush.bf16.msra.mxu0 %v1268
        %1407 = vmatmul.bf16.gmra.mxu0 %v1050
        %v1408 = vpop.f32.mrf.mxu0
        %v1409 = vadd.f32 %v1396, %v1408
        %v1410 = vpop.f32.mrf.mxu0
        %1411 = vdwg.mxu0
        %1412 = vmatpush.bf16.msra.mxu0 %v1298
        %1413 = vmatpush.bf16.msra.mxu0 %v1296
        %1414 = vmatpush.bf16.msra.mxu0 %v1294
        %1415 = vmatpush.bf16.msra.mxu0 %v1292
        %1416 = vmatpush.bf16.msra.mxu0 %v1290
        %1417 = vmatpush.bf16.msra.mxu0 %v1288
        %1418 = vmatpush.bf16.msra.mxu0 %v1286
        %1419 = vmatpush.bf16.msra.mxu0 %v1284
        %1420 = vmatmul.bf16.gmra.mxu0 %v1051
        %v1421 = vpop.f32.mrf.mxu0
        %v1422 = vadd.f32 %v1409, %v1421
        %v1423 = vpop.f32.mrf.mxu0
        %1424 = vdwg.mxu0
        %v1425 = vtanh.pop %v1383
        %v1426 = vtanh.pop %v1422
        %v1427 = vpack.c.bf16 %v1425, %v1425
        %v1428 = vpack.c.bf16 %v1426, %v1426
        %v1429 = vld [vmem:[%s4] sm:$0xf]
        %v1430 = vld [vmem:[%s4 + $0x4] sm:$0xf]
        %v1431 = vld [vmem:[%s4 + $0x8] sm:$0xf]
        %v1432 = vld [vmem:[%s4 + $0xc] sm:$0xf]
        %v1433 = vld [vmem:[%s4 + $0x10] sm:$0xf]
        %v1434 = vld [vmem:[%s4 + $0x14] sm:$0xf]
        %v1435 = vld [vmem:[%s4 + $0x18] sm:$0xf]
        %v1436 = vld [vmem:[%s4 + $0x1c] sm:$0xf]
        %v1437 = vld [vmem:[%s4 + $0x20] sm:$0xf]
        %v1438 = vld [vmem:[%s4 + $0x24] sm:$0xf]
        %v1439 = vld [vmem:[%s4 + $0x28] sm:$0xf]
        %v1440 = vld [vmem:[%s4 + $0x2c] sm:$0xf]
        %v1441 = vld [vmem:[%s4 + $0x30] sm:$0xf]
        %v1442 = vld [vmem:[%s4 + $0x34] sm:$0xf]
        %v1443 = vld [vmem:[%s4 + $0x38] sm:$0xf]
        %v1444 = vld [vmem:[%s4 + $0x3c] sm:$0xf]
        %v1445 = vld [vmem:[%s4 + $0x40] sm:$0xf]
        %v1446 = vld [vmem:[%s4 + $0x44] sm:$0xf]
        %v1447 = vld [vmem:[%s4 + $0x48] sm:$0xf]
        %v1448 = vld [vmem:[%s4 + $0x4c] sm:$0xf]
        %v1449 = vld [vmem:[%s4 + $0x50] sm:$0xf]
        %v1450 = vld [vmem:[%s4 + $0x54] sm:$0xf]
        %v1451 = vld [vmem:[%s4 + $0x58] sm:$0xf]
        %v1452 = vld [vmem:[%s4 + $0x5c] sm:$0xf]
        %v1453 = vld [vmem:[%s4 + $0x60] sm:$0xf]
        %v1454 = vld [vmem:[%s4 + $0x64] sm:$0xf]
        %v1455 = vld [vmem:[%s4 + $0x68] sm:$0xf]
        %v1456 = vld [vmem:[%s4 + $0x6c] sm:$0xf]
        %v1457 = vld [vmem:[%s4 + $0x70] sm:$0xf]
        %v1458 = vld [vmem:[%s4 + $0x74] sm:$0xf]
        %v1459 = vld [vmem:[%s4 + $0x78] sm:$0xf]
        %v1460 = vld [vmem:[%s4 + $0x7c] sm:$0xf]
        %v1461 = vld [vmem:[#allocation12 + $0x3] ss:$0 sm:$0xff]
        %v1494 = vunpack.c.l.b16 %v1429
        %v1495 = vunpack.c.l.b16 %v1430
        %v1496 = vunpack.c.l.b16 %v1431
        %v1497 = vunpack.c.l.b16 %v1432
        %v1498 = vunpack.c.l.b16 %v1433
        %v1499 = vunpack.c.l.b16 %v1434
        %v1500 = vunpack.c.l.b16 %v1435
        %v1501 = vunpack.c.l.b16 %v1436
        %v1502 = vunpack.c.l.b16 %v1437
        %v1503 = vunpack.c.l.b16 %v1438
        %v1504 = vunpack.c.l.b16 %v1439
        %v1505 = vunpack.c.l.b16 %v1440
        %v1506 = vunpack.c.l.b16 %v1441
        %v1507 = vunpack.c.l.b16 %v1442
        %v1508 = vunpack.c.l.b16 %v1443
        %v1509 = vunpack.c.l.b16 %v1444
        %v1510 = vunpack.c.l.b16 %v1445
        %v1511 = vunpack.c.l.b16 %v1446
        %v1512 = vunpack.c.l.b16 %v1447
        %v1513 = vunpack.c.l.b16 %v1448
        %v1514 = vunpack.c.l.b16 %v1449
        %v1515 = vunpack.c.l.b16 %v1450
        %v1516 = vunpack.c.l.b16 %v1451
        %v1517 = vunpack.c.l.b16 %v1452
        %v1518 = vunpack.c.l.b16 %v1453
        %v1519 = vunpack.c.l.b16 %v1454
        %v1520 = vunpack.c.l.b16 %v1455
        %v1521 = vunpack.c.l.b16 %v1456
        %v1522 = vunpack.c.l.b16 %v1457
        %v1523 = vunpack.c.l.b16 %v1458
        %v1524 = vunpack.c.l.b16 %v1459
        %v1525 = vunpack.c.l.b16 %v1460
        %v1526 = vpack.c.b16 %v1495, %v1494
        %v1527 = vpack.c.b16 %v1497, %v1496
        %v1528 = vpack.c.b16 %v1499, %v1498
        %v1529 = vpack.c.b16 %v1501, %v1500
        %v1530 = vpack.c.b16 %v1503, %v1502
        %v1531 = vpack.c.b16 %v1505, %v1504
        %v1532 = vpack.c.b16 %v1507, %v1506
        %v1533 = vpack.c.b16 %v1509, %v1508
        %v1534 = vpack.c.b16 %v1511, %v1510
        %v1535 = vpack.c.b16 %v1513, %v1512
        %v1536 = vpack.c.b16 %v1515, %v1514
        %v1537 = vpack.c.b16 %v1517, %v1516
        %v1538 = vpack.c.b16 %v1519, %v1518
        %v1539 = vpack.c.b16 %v1521, %v1520
        %v1540 = vpack.c.b16 %v1523, %v1522
        %v1541 = vpack.c.b16 %v1525, %v1524
        %1558 = vmatpush.bf16.msra.mxu0 %v1533
        %1559 = vmatpush.bf16.msra.mxu0 %v1532
        %1560 = vmatpush.bf16.msra.mxu0 %v1531
        %1561 = vmatpush.bf16.msra.mxu0 %v1530
        %1562 = vmatpush.bf16.msra.mxu0 %v1529
        %1563 = vmatpush.bf16.msra.mxu0 %v1528
        %1564 = vmatpush.bf16.msra.mxu0 %v1527
        %1565 = vmatpush.bf16.msra.mxu0 %v1526
        %1566 = vmatmul.bf16.gmra.mxu0 %v1427
        %v1567 = vpop.f32.mrf.mxu0
        %v1568 = vadd.f32 %v1461, %v1567
        %v1569 = vpop.f32.mrf.mxu0
        %1570 = vdwg.mxu0
        %1571 = vmatpush.bf16.msra.mxu0 %v1541
        %1572 = vmatpush.bf16.msra.mxu0 %v1540
        %1573 = vmatpush.bf16.msra.mxu0 %v1539
        %1574 = vmatpush.bf16.msra.mxu0 %v1538
        %1575 = vmatpush.bf16.msra.mxu0 %v1537
        %1576 = vmatpush.bf16.msra.mxu0 %v1536
        %1577 = vmatpush.bf16.msra.mxu0 %v1535
        %1578 = vmatpush.bf16.msra.mxu0 %v1534
        %1579 = vmatmul.bf16.gmra.mxu0 %v1428
        %v1580 = vpop.f32.mrf.mxu0
        %v1581 = vadd.f32 %v1568, %v1580
        %v1582 = vpop.f32.mrf.mxu0
        %1583 = vdwg.mxu0
        %v1584 = vtanh.pop %v1581
        %v1585 = vpack.c.bf16 %v1584, %v1584
        %v1586 = vld [vmem:[#allocation7] sm:$0xf]
        %v1587 = vld [vmem:[#allocation7 + $0x4] sm:$0xf]
        %v1588 = vld [vmem:[#allocation7 + $0x8] sm:$0xf]
        %v1589 = vld [vmem:[#allocation7 + $0xc] sm:$0xf]
        %v1590 = vld [vmem:[#allocation7 + $0x10] sm:$0xf]
        %v1591 = vld [vmem:[#allocation7 + $0x14] sm:$0xf]
        %v1592 = vld [vmem:[#allocation7 + $0x18] sm:$0xf]
        %v1593 = vld [vmem:[#allocation7 + $0x1c] sm:$0xf]
        %v1594 = vld [vmem:[#allocation7 + $0x20] sm:$0xf]
        %v1595 = vld [vmem:[#allocation7 + $0x24] sm:$0xf]
        %v1596 = vld [vmem:[#allocation7 + $0x28] sm:$0xf]
        %v1597 = vld [vmem:[#allocation7 + $0x2c] sm:$0xf]
        %v1598 = vld [vmem:[#allocation7 + $0x30] sm:$0xf]
        %v1599 = vld [vmem:[#allocation7 + $0x34] sm:$0xf]
        %v1600 = vld [vmem:[#allocation7 + $0x38] sm:$0xf]
        %v1601 = vld [vmem:[#allocation7 + $0x3c] sm:$0xf]
        %v1602 = vld [vmem:[#allocation12 + $0x4] ss:$0 sm:$0xff]
        %v1619 = vunpack.c.l.b16 %v1586
        %v1620 = vunpack.c.l.b16 %v1587
        %v1621 = vunpack.c.l.b16 %v1588
        %v1622 = vunpack.c.l.b16 %v1589
        %v1623 = vunpack.c.l.b16 %v1590
        %v1624 = vunpack.c.l.b16 %v1591
        %v1625 = vunpack.c.l.b16 %v1592
        %v1626 = vunpack.c.l.b16 %v1593
        %v1627 = vunpack.c.l.b16 %v1594
        %v1628 = vunpack.c.l.b16 %v1595
        %v1629 = vunpack.c.l.b16 %v1596
        %v1630 = vunpack.c.l.b16 %v1597
        %v1631 = vunpack.c.l.b16 %v1598
        %v1632 = vunpack.c.l.b16 %v1599
        %v1633 = vunpack.c.l.b16 %v1600
        %v1634 = vunpack.c.l.b16 %v1601
        %v1635 = vpack.c.b16 %v1620, %v1619
        %v1636 = vpack.c.b16 %v1622, %v1621
        %v1637 = vpack.c.b16 %v1624, %v1623
        %v1638 = vpack.c.b16 %v1626, %v1625
        %v1639 = vpack.c.b16 %v1628, %v1627
        %v1640 = vpack.c.b16 %v1630, %v1629
        %v1641 = vpack.c.b16 %v1632, %v1631
        %v1642 = vpack.c.b16 %v1634, %v1633
        %1651 = vmatpush.bf16.msra.mxu0 %v1642
        %1652 = vmatpush.bf16.msra.mxu0 %v1641
        %1653 = vmatpush.bf16.msra.mxu0 %v1640
        %1654 = vmatpush.bf16.msra.mxu0 %v1639
        %1655 = vmatpush.bf16.msra.mxu0 %v1638
        %1656 = vmatpush.bf16.msra.mxu0 %v1637
        %1657 = vmatpush.bf16.msra.mxu0 %v1636
        %1658 = vmatpush.bf16.msra.mxu0 %v1635
        %1659 = vmatmul.bf16.gmra.mxu0 %v1585
        %v1660 = vpop.f32.mrf.mxu0
        %v1661 = vadd.f32 %v1602, %v1660
        %v1662 = vpop.f32.mrf.mxu0
        %1663 = vdwg.mxu0
        %v1664 = vtanh.pop %v1661
        %v1665 = vpack.c.bf16 %v1664, %v1664
        %v1666 = vld [vmem:[#allocation9] sm:$0xf]
        %v1667 = vld [vmem:[#allocation9 + $0x4] sm:$0xf]
        %v1668 = vld [vmem:[#allocation9 + $0x8] sm:$0xf]
        %v1669 = vld [vmem:[#allocation9 + $0xc] sm:$0xf]
        %v1670 = vld [vmem:[#allocation9 + $0x10] sm:$0xf]
        %v1671 = vld [vmem:[#allocation9 + $0x14] sm:$0xf]
        %v1672 = vld [vmem:[#allocation9 + $0x18] sm:$0xf]
        %v1673 = vld [vmem:[#allocation9 + $0x1c] sm:$0xf]
        %v1674 = vld [vmem:[#allocation9 + $0x20] sm:$0xf]
        %v1675 = vld [vmem:[#allocation9 + $0x24] sm:$0xf]
        %v1676 = vld [vmem:[#allocation9 + $0x28] sm:$0xf]
        %v1677 = vld [vmem:[#allocation9 + $0x2c] sm:$0xf]
        %v1678 = vld [vmem:[#allocation9 + $0x30] sm:$0xf]
        %v1679 = vld [vmem:[#allocation9 + $0x34] sm:$0xf]
        %v1680 = vld [vmem:[#allocation9 + $0x38] sm:$0xf]
        %v1681 = vld [vmem:[#allocation9 + $0x3c] sm:$0xf]
        %v1682 = vld [vmem:[#allocation12 + $0x5] ss:$0 sm:$0xff]
        %v1699 = vunpack.c.l.b16 %v1666
        %v1700 = vunpack.c.l.b16 %v1667
        %v1701 = vunpack.c.l.b16 %v1668
        %v1702 = vunpack.c.l.b16 %v1669
        %v1703 = vunpack.c.l.b16 %v1670
        %v1704 = vunpack.c.l.b16 %v1671
        %v1705 = vunpack.c.l.b16 %v1672
        %v1706 = vunpack.c.l.b16 %v1673
        %v1707 = vunpack.c.l.b16 %v1674
        %v1708 = vunpack.c.l.b16 %v1675
        %v1709 = vunpack.c.l.b16 %v1676
        %v1710 = vunpack.c.l.b16 %v1677
        %v1711 = vunpack.c.l.b16 %v1678
        %v1712 = vunpack.c.l.b16 %v1679
        %v1713 = vunpack.c.l.b16 %v1680
        %v1714 = vunpack.c.l.b16 %v1681
        %v1715 = vpack.c.b16 %v1700, %v1699
        %v1716 = vpack.c.b16 %v1702, %v1701
        %v1717 = vpack.c.b16 %v1704, %v1703
        %v1718 = vpack.c.b16 %v1706, %v1705
        %v1719 = vpack.c.b16 %v1708, %v1707
        %v1720 = vpack.c.b16 %v1710, %v1709
        %v1721 = vpack.c.b16 %v1712, %v1711
        %v1722 = vpack.c.b16 %v1714, %v1713
        %1731 = vmatpush.bf16.msra.mxu0 %v1722
        %1732 = vmatpush.bf16.msra.mxu0 %v1721
        %1733 = vmatpush.bf16.msra.mxu0 %v1720
        %1734 = vmatpush.bf16.msra.mxu0 %v1719
        %1735 = vmatpush.bf16.msra.mxu0 %v1718
        %1736 = vmatpush.bf16.msra.mxu0 %v1717
        %1737 = vmatpush.bf16.msra.mxu0 %v1716
        %1738 = vmatpush.bf16.msra.mxu0 %v1715
        %1739 = vmatmul.bf16.gmra.mxu0 %v1665
        %v1740 = vpop.f32.mrf.mxu0
        %v1741 = vadd.f32 %v1682, %v1740
        %v1742 = vpop.f32.mrf.mxu0
        %1743 = vdwg.mxu0
        %v1744 = vtanh.pop %v1741
        %v1745 = vpack.c.bf16 %v1744, %v1744
        %v1746 = vld [vmem:[#allocation10] sm:$0xf]
        %v1747 = vld [vmem:[#allocation10 + $0x4] sm:$0xf]
        %v1748 = vld [vmem:[#allocation10 + $0x8] sm:$0xf]
        %v1749 = vld [vmem:[#allocation10 + $0xc] sm:$0xf]
        %v1750 = vld [vmem:[#allocation10 + $0x10] sm:$0xf]
        %v1751 = vld [vmem:[#allocation10 + $0x14] sm:$0xf]
        %v1752 = vld [vmem:[#allocation10 + $0x18] sm:$0xf]
        %v1753 = vld [vmem:[#allocation10 + $0x1c] sm:$0xf]
        %v1754 = vld [vmem:[#allocation10 + $0x20] sm:$0xf]
        %v1755 = vld [vmem:[#allocation10 + $0x24] sm:$0xf]
        %v1756 = vld [vmem:[#allocation10 + $0x28] sm:$0xf]
        %v1757 = vld [vmem:[#allocation10 + $0x2c] sm:$0xf]
        %v1758 = vld [vmem:[#allocation10 + $0x30] sm:$0xf]
        %v1759 = vld [vmem:[#allocation10 + $0x34] sm:$0xf]
        %v1760 = vld [vmem:[#allocation10 + $0x38] sm:$0xf]
        %v1761 = vld [vmem:[#allocation10 + $0x3c] sm:$0xf]
        %v1762 = vld [vmem:[#allocation12 + $0x6] ss:$0 sm:$0xff]
        %v1779 = vunpack.c.l.b16 %v1746
        %v1780 = vunpack.c.l.b16 %v1747
        %v1781 = vunpack.c.l.b16 %v1748
        %v1782 = vunpack.c.l.b16 %v1749
        %v1783 = vunpack.c.l.b16 %v1750
        %v1784 = vunpack.c.l.b16 %v1751
        %v1785 = vunpack.c.l.b16 %v1752
        %v1786 = vunpack.c.l.b16 %v1753
        %v1787 = vunpack.c.l.b16 %v1754
        %v1788 = vunpack.c.l.b16 %v1755
        %v1789 = vunpack.c.l.b16 %v1756
        %v1790 = vunpack.c.l.b16 %v1757
        %v1791 = vunpack.c.l.b16 %v1758
        %v1792 = vunpack.c.l.b16 %v1759
        %v1793 = vunpack.c.l.b16 %v1760
        %v1794 = vunpack.c.l.b16 %v1761
        %v1795 = vpack.c.b16 %v1780, %v1779
        %v1796 = vpack.c.b16 %v1782, %v1781
        %v1797 = vpack.c.b16 %v1784, %v1783
        %v1798 = vpack.c.b16 %v1786, %v1785
        %v1799 = vpack.c.b16 %v1788, %v1787
        %v1800 = vpack.c.b16 %v1790, %v1789
        %v1801 = vpack.c.b16 %v1792, %v1791
        %v1802 = vpack.c.b16 %v1794, %v1793
        %1811 = vmatpush.bf16.msra.mxu0 %v1802
        %1812 = vmatpush.bf16.msra.mxu0 %v1801
        %1813 = vmatpush.bf16.msra.mxu0 %v1800
        %1814 = vmatpush.bf16.msra.mxu0 %v1799
        %1815 = vmatpush.bf16.msra.mxu0 %v1798
        %1816 = vmatpush.bf16.msra.mxu0 %v1797
        %1817 = vmatpush.bf16.msra.mxu0 %v1796
        %1818 = vmatpush.bf16.msra.mxu0 %v1795
        %1819 = vmatmul.bf16.gmra.mxu0 %v1745
        %v1820 = vpop.f32.mrf.mxu0
        %v1821 = vadd.f32 %v1762, %v1820
        %v1822 = vpop.f32.mrf.mxu0
        %1823 = vdwg.mxu0
        %1824 = vst [vmem:[%s444] sm:$0xff] %v1821
        %p1825 = scmp.lt.s32.totalorder %s24, 1
        %s1826 = scalar_select %p1825, %s24, 1
        %s1827 = smul.addr %s1826, 8
        %s1828 = scalar_lea.vmem %s9, %s1827
        // Predicated region
        $region85: #{_lambda_.1} parent=55 // pred_check
          %p1829 = pneg %p236
        $region86: #{_lambda_.1} parent=55 // pred_check_branch
          %1831 = sbr.rel (%p1829) target = $region88
        $region87: #{_lambda_.1} parent=55 // pred_region
          _
        $region88: #{_lambda_.1} parent=55 // pred_fallthru
          _
      $region56: #{_lambda_.1} parent=5 // pred_fallthru
        _
      %p1832 = scmp.le.s32.totalorder 2, %s19
      // Predicated region
      $region89: #{_lambda_.1} parent=5 // pred_check
        %p1833 = pneg %p1832
      $region90: #{_lambda_.1} parent=5 // pred_check_branch
        %1835 = sbr.rel (%p1833) target = $region92
      $region91: #{_lambda_.1} parent=5 // pred_region
        %s1836 = ssub.s32 %s19, 2
        // Predicated region
        $region93: #{_lambda_.1} parent=91 // pred_check
          %p1837 = pneg %p242
        $region94: #{_lambda_.1} parent=91 // pred_check_branch
          %1839 = sbr.rel (%p1837) target = $region96
        $region95: #{_lambda_.1} parent=91 // pred_region
          %p1840 = scmp.lt.s32.totalorder %s25, 1
          %s1841 = scalar_select %p1840, %s25, 1
          %s1842 = smul.addr %s1841, 8
          %s1843 = scalar_lea.vmem %s9, %s1842
        $region96: #{_lambda_.1} parent=91 // pred_fallthru
          _
      $region92: #{_lambda_.1} parent=5 // pred_fallthru
        _
    $region6: #{_lambda_.1} parent=1 // loop_footer
      %s23 = sadd.s32 1, %s19
    $region7: #{_lambda_.1} parent=1 // loop_footer_branch
      %18 = sbr.rel target = $region3
    $region8: #{_lambda_.1} parent=1 // loop_exit
      _
    %1844 = vsyncpa [#allocation3], 1
    %s1845 = scalar_lea.sflag [#allocation3], 1
    %1846 = vsyncpa %s1845, 1
    %1847 = vsyncpa [#allocation5], 1
    %1848 = vsyncpa [#allocation8], 1
    %1849 = vsyncpa [#allocation11], 1

</llo_original>
